<compile_context>
chip_gen: v5e
topology: v5e:2x2
jax: 0.10.0
libtpu: 0.0.40
codegen_flags: <defaults>
</compile_context>

<pallas_src>
import functools

import jax
import jax.numpy as jnp
from jax.experimental import pallas as pl
from jax.experimental.pallas import tpu as pltpu


def _round_up(x, m):
    return (x + m - 1) // m * m


# ---------------------------------------------------------------------------
# Pallas kernel: tiled (M x K) @ (K x Cout) with K-reduction accumulator,
# + per-channel shift (folded BN / bias) + optional ReLU / sigmoid.
# ---------------------------------------------------------------------------
def _fused_mm_kernel(x_ref, w_ref, shift_ref, o_ref, acc_ref, *, act):
    k = pl.program_id(1)

    @pl.when(k == 0)
    def _():
        acc_ref[...] = jnp.zeros_like(acc_ref)

    acc_ref[...] += jnp.dot(x_ref[...], w_ref[...],
                            preferred_element_type=jnp.float32)

    @pl.when(k == pl.num_programs(1) - 1)
    def _():
        y = acc_ref[...] + shift_ref[...]
        if act == "relu":
            y = jnp.maximum(y, 0.0)
        elif act == "sigmoid":
            y = jax.nn.sigmoid(y)
        o_ref[...] = y.astype(o_ref.dtype)


def fused_matmul_shift_act(x2d, w, shift, act="none", out_dtype=jnp.float32,
                           tm_max=512, tk_max=512):
    """Computes act(x2d @ w + shift) with bf16 MXU inputs and f32 accumulation.

    x2d:   (M, K)  any float dtype (cast to bf16)
    w:     (K, Cout) f32, BN scale already folded in
    shift: (Cout,) f32
    Returns (M, Cout) in out_dtype.
    """
    M, K = x2d.shape
    Cout = w.shape[-1]

    # Lane-dense output: pad Cout up to a multiple of 128 (zero columns).
    Cp = _round_up(Cout, 128)
    if Cp != Cout:
        w = jnp.pad(w, ((0, 0), (0, Cp - Cout)))
        shift = jnp.pad(shift, (0, Cp - Cout))

    # Reduction tiling: pad K to a multiple of tk (tk <= tk_max, mult of 128).
    Kp = _round_up(K, 128)
    tk = min(Kp, tk_max)
    Kp = _round_up(K, tk)
    if Kp != K:
        x2d = jnp.pad(x2d, ((0, 0), (0, Kp - K)))
        w = jnp.pad(w, ((0, Kp - K), (0, 0)))

    # Pixel tiling: batch+pixels flattened into M; pad to a multiple of tm.
    Mp = _round_up(M, 8)
    tm = min(Mp, tm_max)
    Mp = _round_up(M, tm)
    if Mp != M:
        x2d = jnp.pad(x2d, ((0, Mp - M), (0, 0)))

    nm, nk = Mp // tm, Kp // tk

    x_bf = x2d.astype(jnp.bfloat16)
    w_bf = w.astype(jnp.bfloat16)
    shift2 = shift.reshape(1, Cp).astype(jnp.float32)

    out_bytes = jnp.dtype(out_dtype).itemsize
    cost = pl.CostEstimate(
        flops=2 * Mp * Kp * Cp,
        transcendentals=(Mp * Cp if act == "sigmoid" else 0),
        bytes_accessed=Mp * Kp * 2 + nm * Kp * Cp * 2 + Mp * Cp * out_bytes,
    )

    kern = functools.partial(_fused_mm_kernel, act=act)
    out = pl.pallas_call(
        kern,
        out_shape=jax.ShapeDtypeStruct((Mp, Cp), out_dtype),
        grid=(nm, nk),
        in_specs=[
            pl.BlockSpec((tm, tk), lambda m, k: (m, k)),
            pl.BlockSpec((tk, Cp), lambda m, k: (k, 0)),
            pl.BlockSpec((1, Cp), lambda m, k: (0, 0)),
        ],
        out_specs=pl.BlockSpec((tm, Cp), lambda m, k: (m, 0)),
        scratch_shapes=[pltpu.VMEM((tm, Cp), jnp.float32)],
        compiler_params=pltpu.CompilerParams(
            dimension_semantics=("parallel", "arbitrary"),
            vmem_limit_bytes=32 * 1024 * 1024,   # safe on v5e/v6e/v7x
        ),
        cost_estimate=cost,
    )(x_bf, w_bf, shift2)
    return out[:M, :Cout]


# ---------------------------------------------------------------------------
# Conv wrappers (im2col / flatten are layout glue; matmul+shift+act is the
# Pallas kernel above).
# ---------------------------------------------------------------------------
def _im2col3x3(x):
    """x: (N,H,W,C) -> (N*H*W, 9*C) bf16 patches, padding=1, stride=1."""
    # TODO(synk): for very large stems the 9x patch tensor could be avoided
    # entirely with an in-kernel per-tap accumulation; bf16 patches halve the
    # HBM traffic in the meantime.
    x = x.astype(jnp.bfloat16)
    N, H, W, C = x.shape
    xp = jnp.pad(x, ((0, 0), (1, 1), (1, 1), (0, 0)))
    cols = []
    for dy in range(3):
        for dx in range(3):
            cols.append(xp[:, dy:dy + H, dx:dx + W, :])
    patches = jnp.concatenate(cols, axis=-1)          # (N,H,W,9C), tap-major
    return patches.reshape(N * H * W, 9 * C)


def conv3x3_bn_act(x, w, gamma, beta, mean, var, act="relu", eps=1e-5,
                   out_dtype=jnp.bfloat16):
    """Fused Conv2d(3x3, pad=1) + BatchNorm (eval, folded) + activation.  NHWC."""
    N, H, W, Cin = x.shape
    Cout = w.shape[-1]
    scale = gamma * jax.lax.rsqrt(var + eps)
    shift = beta - mean * scale
    w_folded = w.reshape(9 * Cin, Cout) * scale[None, :]   # fold BN scale into weights
    y = fused_matmul_shift_act(_im2col3x3(x), w_folded, shift, act, out_dtype)
    return y.reshape(N, H, W, Cout)


def conv1x1_bias_act(x, w, bias, act="none", out_dtype=jnp.float32):
    """Conv2d(1x1) + bias + activation.  NHWC."""
    N, H, W, Cin = x.shape
    Cout = w.shape[-1]
    y = fused_matmul_shift_act(x.reshape(N * H * W, Cin), w, bias, act, out_dtype)
    return y.reshape(N, H, W, Cout)


def space_to_depth(x, r):
    N, H, W, C = x.shape
    x = x.reshape(N, H // r, r, W // r, r, C)
    x = jnp.transpose(x, (0, 1, 3, 2, 4, 5))
    return x.reshape(N, H // r, W // r, r * r * C)


# ---------------------------------------------------------------------------
# Parameter init (deterministic, synthetic).
# ---------------------------------------------------------------------------
def _kaiming(key, shape, fan_in):
    return jax.random.normal(key, shape, jnp.float32) * jnp.sqrt(2.0 / fan_in)


def _bn(key, c):
    k1, k2, k3, k4 = jax.random.split(key, 4)
    return dict(
        g=1.0 + 0.1 * jax.random.normal(k1, (c,), jnp.float32),
        b=0.1 * jax.random.normal(k2, (c,), jnp.float32),
        m=0.1 * jax.random.normal(k3, (c,), jnp.float32),
        v=1.0 + 0.1 * jax.random.uniform(k4, (c,), jnp.float32),
    )


def init_params(key, in_ch, backbone_ch=128, head_channels=32,
                classification_classes=15, localization_classes=4, reg_channels=2):
    ks = list(jax.random.split(key, 24))
    stem_cin = in_ch * 64  # space-to-depth x8

    def conv_head(kw1, kbn, kw2, cin, cout):
        return dict(
            w1=_kaiming(kw1, (3, 3, cin, head_channels), 9 * cin),
            bn=_bn(kbn, head_channels),
            w2=_kaiming(kw2, (head_channels, cout), head_channels),
            b2=jnp.zeros((cout,), jnp.float32) + 0.01,
        )

    return dict(
        backbone=dict(
            stem_w=_kaiming(ks[0], (3, 3, stem_cin, backbone_ch), 9 * stem_cin),
            stem_bn=_bn(ks[1], backbone_ch),
            ppm_w=_kaiming(ks[2], (backbone_ch, backbone_ch), backbone_ch),
            ppm_b=jnp.zeros((backbone_ch,), jnp.float32),
            det_w=_kaiming(ks[3], (backbone_ch, backbone_ch), backbone_ch),
            det_b=jnp.zeros((backbone_ch,), jnp.float32),
            aux_w=_kaiming(ks[4], (backbone_ch, backbone_ch), backbone_ch),
            aux_b=jnp.zeros((backbone_ch,), jnp.float32),
        ),
        classifier=conv_head(ks[5], ks[6], ks[7], backbone_ch, classification_classes),
        centerness=conv_head(ks[8], ks[9], ks[10], localization_classes, localization_classes),
        # TODO(synk): RegressionHead definition not provided; assumed 2-channel offset output.
        regressor=conv_head(ks[11], ks[12], ks[13], localization_classes, reg_channels),
    )


# ---------------------------------------------------------------------------
# Network forward (mirrors Network.forward).
# ---------------------------------------------------------------------------
def _head(p, x, final_act, out_dtype=jnp.float32):
    h = conv3x3_bn_act(x, p["w1"], p["bn"]["g"], p["bn"]["b"], p["bn"]["m"],
                       p["bn"]["v"], act="relu", out_dtype=jnp.bfloat16)
    return conv1x1_bias_act(h, p["w2"], p["b2"], act=final_act, out_dtype=out_dtype)


def _backbone(p, x_nhwc):
    s2d = space_to_depth(x_nhwc, 8)  # (N, H/8, W/8, 64*Cin)
    feat = conv3x3_bn_act(s2d, p["stem_w"], p["stem_bn"]["g"], p["stem_bn"]["b"],
                          p["stem_bn"]["m"], p["stem_bn"]["v"],
                          act="relu", out_dtype=jnp.bfloat16)
    C = p["ppm_w"].shape[-1]
    # Fold ppm+detail5 (only ever consumed as their sum) and fuse with aux:
    # a single lane-dense 1x1 conv with Cout = 2*C over the shared feature map.
    w_fused = jnp.concatenate([p["ppm_w"] + p["det_w"], p["aux_w"]], axis=-1)
    b_fused = jnp.concatenate([p["ppm_b"] + p["det_b"], p["aux_b"]], axis=-1)
    fused = conv1x1_bias_act(feat, w_fused, b_fused, act="none", out_dtype=jnp.float32)
    ppm_plus_det = fused[..., :C]
    aux = fused[..., C:]
    return ppm_plus_det, aux


def network_forward(params, x_nchw):
    x = jnp.transpose(x_nchw, (0, 2, 3, 1))  # NCHW -> NHWC
    ppm_plus_det, aux = _backbone(params["backbone"], x)

    classifier = _head(params["classifier"], ppm_plus_det, final_act="none")  # (N,h,w,Ccls)
    loc = classifier[..., 11:]  # classifier[:, 11:, :] in NCHW == channel slice in NHWC

    centerness = _head(params["centerness"], loc, final_act="sigmoid")  # .sigmoid() fused
    regression = _head(params["regressor"], loc, final_act="none")

    # cm.Upsample(scale_factor=8): bilinear resize (layout glue, not hot path).
    # TODO(synk): jax.image.resize uses half-pixel centers (align_corners=False);
    # verify against cm.Upsample's interpolation mode.
    N, H, W, C = classifier.shape
    classifier_up = jax.image.resize(classifier, (N, H * 8, W * 8, C), method="bilinear")

    to_nchw = lambda t: jnp.transpose(t, (0, 3, 1, 2))
    return ((to_nchw(classifier_up), to_nchw(aux)),
            (to_nchw(centerness), to_nchw(regression)))


# ---------------------------------------------------------------------------
if __name__ == "__main__":
    # Small, module-consistent shapes: batch=2, in-channels=4, spatial=16x16,
    # head_channels=32, classification_classes=15, localization_classes=4.
    key = jax.random.PRNGKey(0)
    kx, kp = jax.random.split(key)
    x = jax.random.normal(kx, (2, 4, 16, 16), jnp.float32)  # NCHW, like PyTorch

    params = init_params(kp, in_ch=4, backbone_ch=128, head_channels=32,
                         classification_classes=15, localization_classes=4,
                         reg_channels=2)

    fwd = jax.jit(network_forward)
    (classifier_out, aux_out), (centerness_out, regression_out) = fwd(params, x)
    jax.block_until_ready((classifier_out, aux_out, centerness_out, regression_out))

    assert classifier_out.shape == (2, 15, 16, 16)
    assert aux_out.shape == (2, 128, 2, 2)
    assert centerness_out.shape == (2, 4, 2, 2)
    assert regression_out.shape == (2, 2, 2, 2)
    assert bool(jnp.isfinite(classifier_out).all())
    assert bool(jnp.isfinite(centerness_out).all())
    assert bool(jnp.isfinite(regression_out).all())
    print("KERNEL_OK")
</pallas_src>

<mosaic_0001>
module attributes {stable_mosaic.version = 11 : i64} {
  func.func @_fused_mm_kernel(%arg0: i32, %arg1: i32, %arg2: memref<8x512xbf16, #tpu.memory_space<vmem>>, %arg3: memref<512x128xbf16, #tpu.memory_space<vmem>>, %arg4: memref<1x128xf32, #tpu.memory_space<vmem>>, %arg5: memref<8x128xbf16, #tpu.memory_space<vmem>>, %arg6: memref<8x128xf32, #tpu.memory_space<vmem>>) attributes {dimension_semantics = [#tpu.dimension_semantics<parallel>, #tpu.dimension_semantics<arbitrary>], iteration_bounds = array<i64: 1, 5>, scalar_prefetch = 0 : i64, scratch_operands = 1 : i64, tpu.core_type = #tpu.core_type<tc>, window_params = [{transform_indices = @transform_0, window_bounds = array<i64: 8, 512>}, {transform_indices = @transform_1, window_bounds = array<i64: 512, 128>}, {pipeline_mode = #tpu.pipeline_mode<synchronous>, transform_indices = @transform_2, window_bounds = array<i64: 1, 128>}, {transform_indices = @transform_3, window_bounds = array<i64: 8, 128>}]} {
    %c0_i32 = arith.constant 0 : i32
    %0 = arith.cmpi eq, %arg1, %c0_i32 : i32
    %1 = arith.extui %0 : i1 to i32
    %c0_i32_0 = arith.constant 0 : i32
    %2 = arith.cmpi ne, %1, %c0_i32_0 : i32
    scf.if %2 {
      %cst_9 = arith.constant 0.000000e+00 : f32
      %12 = vector.broadcast %cst_9 : f32 to vector<8x128xf32>
      %c0_10 = arith.constant 0 : index
      %c0_11 = arith.constant 0 : index
      %13 = vector.load %arg6[%c0_10, %c0_11] : memref<8x128xf32, #tpu.memory_space<vmem>>, vector<8x128xf32>
      tpu.vector_store %arg6[%c0_10, %c0_11], %12 {strides = array<i32>} : memref<8x128xf32, #tpu.memory_space<vmem>>, vector<8x128xf32>,
    } else {
    }
    %c0 = arith.constant 0 : index
    %c0_1 = arith.constant 0 : index
    %3 = vector.load %arg6[%c0, %c0_1] : memref<8x128xf32, #tpu.memory_space<vmem>>, vector<8x128xf32>
    %c0_2 = arith.constant 0 : index
    %c0_3 = arith.constant 0 : index
    %4 = vector.load %arg2[%c0_2, %c0_3] : memref<8x512xbf16, #tpu.memory_space<vmem>>, vector<8x512xbf16>
    %c0_4 = arith.constant 0 : index
    %c0_5 = arith.constant 0 : index
    %5 = vector.load %arg3[%c0_4, %c0_5] : memref<512x128xbf16, #tpu.memory_space<vmem>>, vector<512x128xbf16>
    %cst = arith.constant dense<0.000000e+00> : vector<8x128xf32>
    %6 = tpu.matmul %4, %5, %cst {dimension_numbers = #tpu.dot_dimension_numbers<[1], [0], [0], [1], [0, 0, 1, 1], [], []>} : vector<8x512xbf16>, vector<512x128xbf16>, vector<8x128xf32> -> vector<8x128xf32>
    %7 = arith.addf %3, %6 : vector<8x128xf32>
    %c0_6 = arith.constant 0 : index
    %c0_7 = arith.constant 0 : index
    %8 = vector.load %arg6[%c0_6, %c0_7] : memref<8x128xf32, #tpu.memory_space<vmem>>, vector<8x128xf32>
    tpu.vector_store %arg6[%c0_6, %c0_7], %7 {strides = array<i32>} : memref<8x128xf32, #tpu.memory_space<vmem>>, vector<8x128xf32>,
    %c4_i32 = arith.constant 4 : i32
    %9 = arith.cmpi eq, %arg1, %c4_i32 : i32
    %10 = arith.extui %9 : i1 to i32
    %c0_i32_8 = arith.constant 0 : i32
    %11 = arith.cmpi ne, %10, %c0_i32_8 : i32
    scf.if %11 {
      %c0_9 = arith.constant 0 : index
      %c0_10 = arith.constant 0 : index
      %12 = vector.load %arg6[%c0_9, %c0_10] : memref<8x128xf32, #tpu.memory_space<vmem>>, vector<8x128xf32>
      %c0_11 = arith.constant 0 : index
      %c0_12 = arith.constant 0 : index
      %13 = vector.load %arg4[%c0_11, %c0_12] : memref<1x128xf32, #tpu.memory_space<vmem>>, vector<1x128xf32>
      %14 = vector.broadcast %13 : vector<1x128xf32> to vector<8x128xf32>
      %15 = arith.addf %12, %14 : vector<8x128xf32>
      %cst_13 = arith.constant 0.000000e+00 : f32
      %16 = vector.broadcast %cst_13 : f32 to vector<8x128xf32>
      %17 = arith.maximumf %15, %16 : vector<8x128xf32>
      %18 = arith.truncf %17 : vector<8x128xf32> to vector<8x128xbf16>
      %c0_14 = arith.constant 0 : index
      %c0_15 = arith.constant 0 : index
      %19 = vector.load %arg5[%c0_14, %c0_15] : memref<8x128xbf16, #tpu.memory_space<vmem>>, vector<8x128xbf16>
      tpu.vector_store %arg5[%c0_14, %c0_15], %18 {strides = array<i32>} : memref<8x128xbf16, #tpu.memory_space<vmem>>, vector<8x128xbf16>,
    } else {
    }
    return
  }
  func.func @transform_0(%arg0: i32, %arg1: i32) -> (i32, i32) {
    %c0_i32 = arith.constant 0 : i32
    return %arg0, %arg1 : i32, i32
  }
  func.func @transform_1(%arg0: i32, %arg1: i32) -> (i32, i32) {
    %c0_i32 = arith.constant 0 : i32
    %c0_i32_0 = arith.constant 0 : i32
    return %arg1, %c0_i32 : i32, i32
  }
  func.func @transform_2(%arg0: i32, %arg1: i32) -> (i32, i32) {
    %c0_i32 = arith.constant 0 : i32
    %c0_i32_0 = arith.constant 0 : i32
    %c0_i32_1 = arith.constant 0 : i32
    return %c0_i32, %c0_i32_0 : i32, i32
  }
  func.func @transform_3(%arg0: i32, %arg1: i32) -> (i32, i32) {
    %c0_i32 = arith.constant 0 : i32
    %c0_i32_0 = arith.constant 0 : i32
    return %arg0, %c0_i32 : i32, i32
  }
}

module attributes {stable_mosaic.version = 11 : i64} {
  func.func @_fused_mm_kernel(%arg0: i32, %arg1: i32, %arg2: memref<8x128xbf16, #tpu.memory_space<vmem>>, %arg3: memref<128x256xbf16, #tpu.memory_space<vmem>>, %arg4: memref<1x256xf32, #tpu.memory_space<vmem>>, %arg5: memref<8x256xf32, #tpu.memory_space<vmem>>, %arg6: memref<8x256xf32, #tpu.memory_space<vmem>>) attributes {dimension_semantics = [#tpu.dimension_semantics<parallel>, #tpu.dimension_semantics<arbitrary>], iteration_bounds = array<i64: 1, 1>, scalar_prefetch = 0 : i64, scratch_operands = 1 : i64, tpu.core_type = #tpu.core_type<tc>, window_params = [{transform_indices = @transform_0, window_bounds = array<i64: 8, 128>}, {transform_indices = @transform_1, window_bounds = array<i64: 128, 256>}, {pipeline_mode = #tpu.pipeline_mode<synchronous>, transform_indices = @transform_2, window_bounds = array<i64: 1, 256>}, {transform_indices = @transform_3, window_bounds = array<i64: 8, 256>}]} {
    %c0_i32 = arith.constant 0 : i32
    %0 = arith.cmpi eq, %arg1, %c0_i32 : i32
    %1 = arith.extui %0 : i1 to i32
    %c0_i32_0 = arith.constant 0 : i32
    %2 = arith.cmpi ne, %1, %c0_i32_0 : i32
    scf.if %2 {
      %cst_10 = arith.constant 0.000000e+00 : f32
      %12 = vector.broadcast %cst_10 : f32 to vector<8x256xf32>
      %c0_11 = arith.constant 0 : index
      %c0_12 = arith.constant 0 : index
      %13 = vector.load %arg6[%c0_11, %c0_12] : memref<8x256xf32, #tpu.memory_space<vmem>>, vector<8x256xf32>
      tpu.vector_store %arg6[%c0_11, %c0_12], %12 {strides = array<i32>} : memref<8x256xf32, #tpu.memory_space<vmem>>, vector<8x256xf32>,
    } else {
    }
    %c0 = arith.constant 0 : index
    %c0_1 = arith.constant 0 : index
    %3 = vector.load %arg6[%c0, %c0_1] : memref<8x256xf32, #tpu.memory_space<vmem>>, vector<8x256xf32>
    %c0_2 = arith.constant 0 : index
    %c0_3 = arith.constant 0 : index
    %4 = vector.load %arg2[%c0_2, %c0_3] : memref<8x128xbf16, #tpu.memory_space<vmem>>, vector<8x128xbf16>
    %c0_4 = arith.constant 0 : index
    %c0_5 = arith.constant 0 : index
    %5 = vector.load %arg3[%c0_4, %c0_5] : memref<128x256xbf16, #tpu.memory_space<vmem>>, vector<128x256xbf16>
    %cst = arith.constant dense<0.000000e+00> : vector<8x256xf32>
    %6 = tpu.matmul %4, %5, %cst {dimension_numbers = #tpu.dot_dimension_numbers<[1], [0], [0], [1], [0, 0, 1, 1], [], []>} : vector<8x128xbf16>, vector<128x256xbf16>, vector<8x256xf32> -> vector<8x256xf32>
    %7 = arith.addf %3, %6 : vector<8x256xf32>
    %c0_6 = arith.constant 0 : index
    %c0_7 = arith.constant 0 : index
    %8 = vector.load %arg6[%c0_6, %c0_7] : memref<8x256xf32, #tpu.memory_space<vmem>>, vector<8x256xf32>
    tpu.vector_store %arg6[%c0_6, %c0_7], %7 {strides = array<i32>} : memref<8x256xf32, #tpu.memory_space<vmem>>, vector<8x256xf32>,
    %c0_i32_8 = arith.constant 0 : i32
    %9 = arith.cmpi eq, %arg1, %c0_i32_8 : i32
    %10 = arith.extui %9 : i1 to i32
    %c0_i32_9 = arith.constant 0 : i32
    %11 = arith.cmpi ne, %10, %c0_i32_9 : i32
    scf.if %11 {
      %c0_10 = arith.constant 0 : index
      %c0_11 = arith.constant 0 : index
      %12 = vector.load %arg6[%c0_10, %c0_11] : memref<8x256xf32, #tpu.memory_space<vmem>>, vector<8x256xf32>
      %c0_12 = arith.constant 0 : index
      %c0_13 = arith.constant 0 : index
      %13 = vector.load %arg4[%c0_12, %c0_13] : memref<1x256xf32, #tpu.memory_space<vmem>>, vector<1x256xf32>
      %14 = vector.broadcast %13 : vector<1x256xf32> to vector<8x256xf32>
      %15 = arith.addf %12, %14 : vector<8x256xf32>
      %c0_14 = arith.constant 0 : index
      %c0_15 = arith.constant 0 : index
      %16 = vector.load %arg5[%c0_14, %c0_15] : memref<8x256xf32, #tpu.memory_space<vmem>>, vector<8x256xf32>
      tpu.vector_store %arg5[%c0_14, %c0_15], %15 {strides = array<i32>} : memref<8x256xf32, #tpu.memory_space<vmem>>, vector<8x256xf32>,
    } else {
    }
    return
  }
  func.func @transform_0(%arg0: i32, %arg1: i32) -> (i32, i32) {
    %c0_i32 = arith.constant 0 : i32
    return %arg0, %arg1 : i32, i32
  }
  func.func @transform_1(%arg0: i32, %arg1: i32) -> (i32, i32) {
    %c0_i32 = arith.constant 0 : i32
    %c0_i32_0 = arith.constant 0 : i32
    return %arg1, %c0_i32 : i32, i32
  }
  func.func @transform_2(%arg0: i32, %arg1: i32) -> (i32, i32) {
    %c0_i32 = arith.constant 0 : i32
    %c0_i32_0 = arith.constant 0 : i32
    %c0_i32_1 = arith.constant 0 : i32
    return %c0_i32, %c0_i32_0 : i32, i32
  }
  func.func @transform_3(%arg0: i32, %arg1: i32) -> (i32, i32) {
    %c0_i32 = arith.constant 0 : i32
    %c0_i32_0 = arith.constant 0 : i32
    return %arg0, %c0_i32 : i32, i32
  }
}

module attributes {stable_mosaic.version = 11 : i64} {
  func.func @_fused_mm_kernel(%arg0: i32, %arg1: i32, %arg2: memref<8x512xbf16, #tpu.memory_space<vmem>>, %arg3: memref<512x128xbf16, #tpu.memory_space<vmem>>, %arg4: memref<1x128xf32, #tpu.memory_space<vmem>>, %arg5: memref<8x128xbf16, #tpu.memory_space<vmem>>, %arg6: memref<8x128xf32, #tpu.memory_space<vmem>>) attributes {dimension_semantics = [#tpu.dimension_semantics<parallel>, #tpu.dimension_semantics<arbitrary>], iteration_bounds = array<i64: 1, 3>, scalar_prefetch = 0 : i64, scratch_operands = 1 : i64, tpu.core_type = #tpu.core_type<tc>, window_params = [{transform_indices = @transform_0, window_bounds = array<i64: 8, 512>}, {transform_indices = @transform_1, window_bounds = array<i64: 512, 128>}, {pipeline_mode = #tpu.pipeline_mode<synchronous>, transform_indices = @transform_2, window_bounds = array<i64: 1, 128>}, {transform_indices = @transform_3, window_bounds = array<i64: 8, 128>}]} {
    %c0_i32 = arith.constant 0 : i32
    %0 = arith.cmpi eq, %arg1, %c0_i32 : i32
    %1 = arith.extui %0 : i1 to i32
    %c0_i32_0 = arith.constant 0 : i32
    %2 = arith.cmpi ne, %1, %c0_i32_0 : i32
    scf.if %2 {
      %cst_9 = arith.constant 0.000000e+00 : f32
      %12 = vector.broadcast %cst_9 : f32 to vector<8x128xf32>
      %c0_10 = arith.constant 0 : index
      %c0_11 = arith.constant 0 : index
      %13 = vector.load %arg6[%c0_10, %c0_11] : memref<8x128xf32, #tpu.memory_space<vmem>>, vector<8x128xf32>
      tpu.vector_store %arg6[%c0_10, %c0_11], %12 {strides = array<i32>} : memref<8x128xf32, #tpu.memory_space<vmem>>, vector<8x128xf32>,
    } else {
    }
    %c0 = arith.constant 0 : index
    %c0_1 = arith.constant 0 : index
    %3 = vector.load %arg6[%c0, %c0_1] : memref<8x128xf32, #tpu.memory_space<vmem>>, vector<8x128xf32>
    %c0_2 = arith.constant 0 : index
    %c0_3 = arith.constant 0 : index
    %4 = vector.load %arg2[%c0_2, %c0_3] : memref<8x512xbf16, #tpu.memory_space<vmem>>, vector<8x512xbf16>
    %c0_4 = arith.constant 0 : index
    %c0_5 = arith.constant 0 : index
    %5 = vector.load %arg3[%c0_4, %c0_5] : memref<512x128xbf16, #tpu.memory_space<vmem>>, vector<512x128xbf16>
    %cst = arith.constant dense<0.000000e+00> : vector<8x128xf32>
    %6 = tpu.matmul %4, %5, %cst {dimension_numbers = #tpu.dot_dimension_numbers<[1], [0], [0], [1], [0, 0, 1, 1], [], []>} : vector<8x512xbf16>, vector<512x128xbf16>, vector<8x128xf32> -> vector<8x128xf32>
    %7 = arith.addf %3, %6 : vector<8x128xf32>
    %c0_6 = arith.constant 0 : index
    %c0_7 = arith.constant 0 : index
    %8 = vector.load %arg6[%c0_6, %c0_7] : memref<8x128xf32, #tpu.memory_space<vmem>>, vector<8x128xf32>
    tpu.vector_store %arg6[%c0_6, %c0_7], %7 {strides = array<i32>} : memref<8x128xf32, #tpu.memory_space<vmem>>, vector<8x128xf32>,
    %c2_i32 = arith.constant 2 : i32
    %9 = arith.cmpi eq, %arg1, %c2_i32 : i32
    %10 = arith.extui %9 : i1 to i32
    %c0_i32_8 = arith.constant 0 : i32
    %11 = arith.cmpi ne, %10, %c0_i32_8 : i32
    scf.if %11 {
      %c0_9 = arith.constant 0 : index
      %c0_10 = arith.constant 0 : index
      %12 = vector.load %arg6[%c0_9, %c0_10] : memref<8x128xf32, #tpu.memory_space<vmem>>, vector<8x128xf32>
      %c0_11 = arith.constant 0 : index
      %c0_12 = arith.constant 0 : index
      %13 = vector.load %arg4[%c0_11, %c0_12] : memref<1x128xf32, #tpu.memory_space<vmem>>, vector<1x128xf32>
      %14 = vector.broadcast %13 : vector<1x128xf32> to vector<8x128xf32>
      %15 = arith.addf %12, %14 : vector<8x128xf32>
      %cst_13 = arith.constant 0.000000e+00 : f32
      %16 = vector.broadcast %cst_13 : f32 to vector<8x128xf32>
      %17 = arith.maximumf %15, %16 : vector<8x128xf32>
      %18 = arith.truncf %17 : vector<8x128xf32> to vector<8x128xbf16>
      %c0_14 = arith.constant 0 : index
      %c0_15 = arith.constant 0 : index
      %19 = vector.load %arg5[%c0_14, %c0_15] : memref<8x128xbf16, #tpu.memory_space<vmem>>, vector<8x128xbf16>
      tpu.vector_store %arg5[%c0_14, %c0_15], %18 {strides = array<i32>} : memref<8x128xbf16, #tpu.memory_space<vmem>>, vector<8x128xbf16>,
    } else {
    }
    return
  }
  func.func @transform_0(%arg0: i32, %arg1: i32) -> (i32, i32) {
    %c0_i32 = arith.constant 0 : i32
    return %arg0, %arg1 : i32, i32
  }
  func.func @transform_1(%arg0: i32, %arg1: i32) -> (i32, i32) {
    %c0_i32 = arith.constant 0 : i32
    %c0_i32_0 = arith.constant 0 : i32
    return %arg1, %c0_i32 : i32, i32
  }
  func.func @transform_2(%arg0: i32, %arg1: i32) -> (i32, i32) {
    %c0_i32 = arith.constant 0 : i32
    %c0_i32_0 = arith.constant 0 : i32
    %c0_i32_1 = arith.constant 0 : i32
    return %c0_i32, %c0_i32_0 : i32, i32
  }
  func.func @transform_3(%arg0: i32, %arg1: i32) -> (i32, i32) {
    %c0_i32 = arith.constant 0 : i32
    %c0_i32_0 = arith.constant 0 : i32
    return %arg0, %c0_i32 : i32, i32
  }
}

module attributes {stable_mosaic.version = 11 : i64} {
  func.func @_fused_mm_kernel(%arg0: i32, %arg1: i32, %arg2: memref<8x128xbf16, #tpu.memory_space<vmem>>, %arg3: memref<128x128xbf16, #tpu.memory_space<vmem>>, %arg4: memref<1x128xf32, #tpu.memory_space<vmem>>, %arg5: memref<8x128xf32, #tpu.memory_space<vmem>>, %arg6: memref<8x128xf32, #tpu.memory_space<vmem>>) attributes {dimension_semantics = [#tpu.dimension_semantics<parallel>, #tpu.dimension_semantics<arbitrary>], iteration_bounds = array<i64: 1, 1>, scalar_prefetch = 0 : i64, scratch_operands = 1 : i64, tpu.core_type = #tpu.core_type<tc>, window_params = [{transform_indices = @transform_0, window_bounds = array<i64: 8, 128>}, {transform_indices = @transform_1, window_bounds = array<i64: 128, 128>}, {pipeline_mode = #tpu.pipeline_mode<synchronous>, transform_indices = @transform_2, window_bounds = array<i64: 1, 128>}, {transform_indices = @transform_3, window_bounds = array<i64: 8, 128>}]} {
    %c0_i32 = arith.constant 0 : i32
    %0 = arith.cmpi eq, %arg1, %c0_i32 : i32
    %1 = arith.extui %0 : i1 to i32
    %c0_i32_0 = arith.constant 0 : i32
    %2 = arith.cmpi ne, %1, %c0_i32_0 : i32
    scf.if %2 {
      %cst_10 = arith.constant 0.000000e+00 : f32
      %12 = vector.broadcast %cst_10 : f32 to vector<8x128xf32>
      %c0_11 = arith.constant 0 : index
      %c0_12 = arith.constant 0 : index
      %13 = vector.load %arg6[%c0_11, %c0_12] : memref<8x128xf32, #tpu.memory_space<vmem>>, vector<8x128xf32>
      tpu.vector_store %arg6[%c0_11, %c0_12], %12 {strides = array<i32>} : memref<8x128xf32, #tpu.memory_space<vmem>>, vector<8x128xf32>,
    } else {
    }
    %c0 = arith.constant 0 : index
    %c0_1 = arith.constant 0 : index
    %3 = vector.load %arg6[%c0, %c0_1] : memref<8x128xf32, #tpu.memory_space<vmem>>, vector<8x128xf32>
    %c0_2 = arith.constant 0 : index
    %c0_3 = arith.constant 0 : index
    %4 = vector.load %arg2[%c0_2, %c0_3] : memref<8x128xbf16, #tpu.memory_space<vmem>>, vector<8x128xbf16>
    %c0_4 = arith.constant 0 : index
    %c0_5 = arith.constant 0 : index
    %5 = vector.load %arg3[%c0_4, %c0_5] : memref<128x128xbf16, #tpu.memory_space<vmem>>, vector<128x128xbf16>
    %cst = arith.constant dense<0.000000e+00> : vector<8x128xf32>
    %6 = tpu.matmul %4, %5, %cst {dimension_numbers = #tpu.dot_dimension_numbers<[1], [0], [0], [1], [0, 0, 1, 1], [], []>} : vector<8x128xbf16>, vector<128x128xbf16>, vector<8x128xf32> -> vector<8x128xf32>
    %7 = arith.addf %3, %6 : vector<8x128xf32>
    %c0_6 = arith.constant 0 : index
    %c0_7 = arith.constant 0 : index
    %8 = vector.load %arg6[%c0_6, %c0_7] : memref<8x128xf32, #tpu.memory_space<vmem>>, vector<8x128xf32>
    tpu.vector_store %arg6[%c0_6, %c0_7], %7 {strides = array<i32>} : memref<8x128xf32, #tpu.memory_space<vmem>>, vector<8x128xf32>,
    %c0_i32_8 = arith.constant 0 : i32
    %9 = arith.cmpi eq, %arg1, %c0_i32_8 : i32
    %10 = arith.extui %9 : i1 to i32
    %c0_i32_9 = arith.constant 0 : i32
    %11 = arith.cmpi ne, %10, %c0_i32_9 : i32
    scf.if %11 {
      %c0_10 = arith.constant 0 : index
      %c0_11 = arith.constant 0 : index
      %12 = vector.load %arg6[%c0_10, %c0_11] : memref<8x128xf32, #tpu.memory_space<vmem>>, vector<8x128xf32>
      %c0_12 = arith.constant 0 : index
      %c0_13 = arith.constant 0 : index
      %13 = vector.load %arg4[%c0_12, %c0_13] : memref<1x128xf32, #tpu.memory_space<vmem>>, vector<1x128xf32>
      %14 = vector.broadcast %13 : vector<1x128xf32> to vector<8x128xf32>
      %15 = arith.addf %12, %14 : vector<8x128xf32>
      %c0_14 = arith.constant 0 : index
      %c0_15 = arith.constant 0 : index
      %16 = vector.load %arg5[%c0_14, %c0_15] : memref<8x128xf32, #tpu.memory_space<vmem>>, vector<8x128xf32>
      tpu.vector_store %arg5[%c0_14, %c0_15], %15 {strides = array<i32>} : memref<8x128xf32, #tpu.memory_space<vmem>>, vector<8x128xf32>,
    } else {
    }
    return
  }
  func.func @transform_0(%arg0: i32, %arg1: i32) -> (i32, i32) {
    %c0_i32 = arith.constant 0 : i32
    return %arg0, %arg1 : i32, i32
  }
  func.func @transform_1(%arg0: i32, %arg1: i32) -> (i32, i32) {
    %c0_i32 = arith.constant 0 : i32
    %c0_i32_0 = arith.constant 0 : i32
    return %arg1, %c0_i32 : i32, i32
  }
  func.func @transform_2(%arg0: i32, %arg1: i32) -> (i32, i32) {
    %c0_i32 = arith.constant 0 : i32
    %c0_i32_0 = arith.constant 0 : i32
    %c0_i32_1 = arith.constant 0 : i32
    return %c0_i32, %c0_i32_0 : i32, i32
  }
  func.func @transform_3(%arg0: i32, %arg1: i32) -> (i32, i32) {
    %c0_i32 = arith.constant 0 : i32
    %c0_i32_0 = arith.constant 0 : i32
    return %arg0, %c0_i32 : i32, i32
  }
}

module attributes {stable_mosaic.version = 11 : i64} {
  func.func @_fused_mm_kernel(%arg0: i32, %arg1: i32, %arg2: memref<8x128xbf16, #tpu.memory_space<vmem>>, %arg3: memref<128x128xbf16, #tpu.memory_space<vmem>>, %arg4: memref<1x128xf32, #tpu.memory_space<vmem>>, %arg5: memref<8x128xbf16, #tpu.memory_space<vmem>>, %arg6: memref<8x128xf32, #tpu.memory_space<vmem>>) attributes {dimension_semantics = [#tpu.dimension_semantics<parallel>, #tpu.dimension_semantics<arbitrary>], iteration_bounds = array<i64: 1, 1>, scalar_prefetch = 0 : i64, scratch_operands = 1 : i64, tpu.core_type = #tpu.core_type<tc>, window_params = [{transform_indices = @transform_0, window_bounds = array<i64: 8, 128>}, {transform_indices = @transform_1, window_bounds = array<i64: 128, 128>}, {pipeline_mode = #tpu.pipeline_mode<synchronous>, transform_indices = @transform_2, window_bounds = array<i64: 1, 128>}, {transform_indices = @transform_3, window_bounds = array<i64: 8, 128>}]} {
    %c0_i32 = arith.constant 0 : i32
    %0 = arith.cmpi eq, %arg1, %c0_i32 : i32
    %1 = arith.extui %0 : i1 to i32
    %c0_i32_0 = arith.constant 0 : i32
    %2 = arith.cmpi ne, %1, %c0_i32_0 : i32
    scf.if %2 {
      %cst_10 = arith.constant 0.000000e+00 : f32
      %12 = vector.broadcast %cst_10 : f32 to vector<8x128xf32>
      %c0_11 = arith.constant 0 : index
      %c0_12 = arith.constant 0 : index
      %13 = vector.load %arg6[%c0_11, %c0_12] : memref<8x128xf32, #tpu.memory_space<vmem>>, vector<8x128xf32>
      tpu.vector_store %arg6[%c0_11, %c0_12], %12 {strides = array<i32>} : memref<8x128xf32, #tpu.memory_space<vmem>>, vector<8x128xf32>,
    } else {
    }
    %c0 = arith.constant 0 : index
    %c0_1 = arith.constant 0 : index
    %3 = vector.load %arg6[%c0, %c0_1] : memref<8x128xf32, #tpu.memory_space<vmem>>, vector<8x128xf32>
    %c0_2 = arith.constant 0 : index
    %c0_3 = arith.constant 0 : index
    %4 = vector.load %arg2[%c0_2, %c0_3] : memref<8x128xbf16, #tpu.memory_space<vmem>>, vector<8x128xbf16>
    %c0_4 = arith.constant 0 : index
    %c0_5 = arith.constant 0 : index
    %5 = vector.load %arg3[%c0_4, %c0_5] : memref<128x128xbf16, #tpu.memory_space<vmem>>, vector<128x128xbf16>
    %cst = arith.constant dense<0.000000e+00> : vector<8x128xf32>
    %6 = tpu.matmul %4, %5, %cst {dimension_numbers = #tpu.dot_dimension_numbers<[1], [0], [0], [1], [0, 0, 1, 1], [], []>} : vector<8x128xbf16>, vector<128x128xbf16>, vector<8x128xf32> -> vector<8x128xf32>
    %7 = arith.addf %3, %6 : vector<8x128xf32>
    %c0_6 = arith.constant 0 : index
    %c0_7 = arith.constant 0 : index
    %8 = vector.load %arg6[%c0_6, %c0_7] : memref<8x128xf32, #tpu.memory_space<vmem>>, vector<8x128xf32>
    tpu.vector_store %arg6[%c0_6, %c0_7], %7 {strides = array<i32>} : memref<8x128xf32, #tpu.memory_space<vmem>>, vector<8x128xf32>,
    %c0_i32_8 = arith.constant 0 : i32
    %9 = arith.cmpi eq, %arg1, %c0_i32_8 : i32
    %10 = arith.extui %9 : i1 to i32
    %c0_i32_9 = arith.constant 0 : i32
    %11 = arith.cmpi ne, %10, %c0_i32_9 : i32
    scf.if %11 {
      %c0_10 = arith.constant 0 : index
      %c0_11 = arith.constant 0 : index
      %12 = vector.load %arg6[%c0_10, %c0_11] : memref<8x128xf32, #tpu.memory_space<vmem>>, vector<8x128xf32>
      %c0_12 = arith.constant 0 : index
      %c0_13 = arith.constant 0 : index
      %13 = vector.load %arg4[%c0_12, %c0_13] : memref<1x128xf32, #tpu.memory_space<vmem>>, vector<1x128xf32>
      %14 = vector.broadcast %13 : vector<1x128xf32> to vector<8x128xf32>
      %15 = arith.addf %12, %14 : vector<8x128xf32>
      %cst_14 = arith.constant 0.000000e+00 : f32
      %16 = vector.broadcast %cst_14 : f32 to vector<8x128xf32>
      %17 = arith.maximumf %15, %16 : vector<8x128xf32>
      %18 = arith.truncf %17 : vector<8x128xf32> to vector<8x128xbf16>
      %c0_15 = arith.constant 0 : index
      %c0_16 = arith.constant 0 : index
      %19 = vector.load %arg5[%c0_15, %c0_16] : memref<8x128xbf16, #tpu.memory_space<vmem>>, vector<8x128xbf16>
      tpu.vector_store %arg5[%c0_15, %c0_16], %18 {strides = array<i32>} : memref<8x128xbf16, #tpu.memory_space<vmem>>, vector<8x128xbf16>,
    } else {
    }
    return
  }
  func.func @transform_0(%arg0: i32, %arg1: i32) -> (i32, i32) {
    %c0_i32 = arith.constant 0 : i32
    return %arg0, %arg1 : i32, i32
  }
  func.func @transform_1(%arg0: i32, %arg1: i32) -> (i32, i32) {
    %c0_i32 = arith.constant 0 : i32
    %c0_i32_0 = arith.constant 0 : i32
    return %arg1, %c0_i32 : i32, i32
  }
  func.func @transform_2(%arg0: i32, %arg1: i32) -> (i32, i32) {
    %c0_i32 = arith.constant 0 : i32
    %c0_i32_0 = arith.constant 0 : i32
    %c0_i32_1 = arith.constant 0 : i32
    return %c0_i32, %c0_i32_0 : i32, i32
  }
  func.func @transform_3(%arg0: i32, %arg1: i32) -> (i32, i32) {
    %c0_i32 = arith.constant 0 : i32
    %c0_i32_0 = arith.constant 0 : i32
    return %arg0, %c0_i32 : i32, i32
  }
}

module attributes {stable_mosaic.version = 11 : i64} {
  func.func @_fused_mm_kernel(%arg0: i32, %arg1: i32, %arg2: memref<8x128xbf16, #tpu.memory_space<vmem>>, %arg3: memref<128x128xbf16, #tpu.memory_space<vmem>>, %arg4: memref<1x128xf32, #tpu.memory_space<vmem>>, %arg5: memref<8x128xf32, #tpu.memory_space<vmem>>, %arg6: memref<8x128xf32, #tpu.memory_space<vmem>>) attributes {dimension_semantics = [#tpu.dimension_semantics<parallel>, #tpu.dimension_semantics<arbitrary>], iteration_bounds = array<i64: 1, 1>, scalar_prefetch = 0 : i64, scratch_operands = 1 : i64, tpu.core_type = #tpu.core_type<tc>, window_params = [{transform_indices = @transform_0, window_bounds = array<i64: 8, 128>}, {transform_indices = @transform_1, window_bounds = array<i64: 128, 128>}, {pipeline_mode = #tpu.pipeline_mode<synchronous>, transform_indices = @transform_2, window_bounds = array<i64: 1, 128>}, {transform_indices = @transform_3, window_bounds = array<i64: 8, 128>}]} {
    %c0_i32 = arith.constant 0 : i32
    %0 = arith.cmpi eq, %arg1, %c0_i32 : i32
    %1 = arith.extui %0 : i1 to i32
    %c0_i32_0 = arith.constant 0 : i32
    %2 = arith.cmpi ne, %1, %c0_i32_0 : i32
    scf.if %2 {
      %cst_10 = arith.constant 0.000000e+00 : f32
      %12 = vector.broadcast %cst_10 : f32 to vector<8x128xf32>
      %c0_11 = arith.constant 0 : index
      %c0_12 = arith.constant 0 : index
      %13 = vector.load %arg6[%c0_11, %c0_12] : memref<8x128xf32, #tpu.memory_space<vmem>>, vector<8x128xf32>
      tpu.vector_store %arg6[%c0_11, %c0_12], %12 {strides = array<i32>} : memref<8x128xf32, #tpu.memory_space<vmem>>, vector<8x128xf32>,
    } else {
    }
    %c0 = arith.constant 0 : index
    %c0_1 = arith.constant 0 : index
    %3 = vector.load %arg6[%c0, %c0_1] : memref<8x128xf32, #tpu.memory_space<vmem>>, vector<8x128xf32>
    %c0_2 = arith.constant 0 : index
    %c0_3 = arith.constant 0 : index
    %4 = vector.load %arg2[%c0_2, %c0_3] : memref<8x128xbf16, #tpu.memory_space<vmem>>, vector<8x128xbf16>
    %c0_4 = arith.constant 0 : index
    %c0_5 = arith.constant 0 : index
    %5 = vector.load %arg3[%c0_4, %c0_5] : memref<128x128xbf16, #tpu.memory_space<vmem>>, vector<128x128xbf16>
    %cst = arith.constant dense<0.000000e+00> : vector<8x128xf32>
    %6 = tpu.matmul %4, %5, %cst {dimension_numbers = #tpu.dot_dimension_numbers<[1], [0], [0], [1], [0, 0, 1, 1], [], []>} : vector<8x128xbf16>, vector<128x128xbf16>, vector<8x128xf32> -> vector<8x128xf32>
    %7 = arith.addf %3, %6 : vector<8x128xf32>
    %c0_6 = arith.constant 0 : index
    %c0_7 = arith.constant 0 : index
    %8 = vector.load %arg6[%c0_6, %c0_7] : memref<8x128xf32, #tpu.memory_space<vmem>>, vector<8x128xf32>
    tpu.vector_store %arg6[%c0_6, %c0_7], %7 {strides = array<i32>} : memref<8x128xf32, #tpu.memory_space<vmem>>, vector<8x128xf32>,
    %c0_i32_8 = arith.constant 0 : i32
    %9 = arith.cmpi eq, %arg1, %c0_i32_8 : i32
    %10 = arith.extui %9 : i1 to i32
    %c0_i32_9 = arith.constant 0 : i32
    %11 = arith.cmpi ne, %10, %c0_i32_9 : i32
    scf.if %11 {
      %c0_10 = arith.constant 0 : index
      %c0_11 = arith.constant 0 : index
      %12 = vector.load %arg6[%c0_10, %c0_11] : memref<8x128xf32, #tpu.memory_space<vmem>>, vector<8x128xf32>
      %c0_12 = arith.constant 0 : index
      %c0_13 = arith.constant 0 : index
      %13 = vector.load %arg4[%c0_12, %c0_13] : memref<1x128xf32, #tpu.memory_space<vmem>>, vector<1x128xf32>
      %14 = vector.broadcast %13 : vector<1x128xf32> to vector<8x128xf32>
      %15 = arith.addf %12, %14 : vector<8x128xf32>
      %16 = arith.negf %15 : vector<8x128xf32>
      %17 = math.exp %16 : vector<8x128xf32>
      %cst_14 = arith.constant 1.000000e+00 : f32
      %18 = vector.broadcast %cst_14 : f32 to vector<8x128xf32>
      %19 = arith.addf %18, %17 : vector<8x128xf32>
      %20 = arith.divf %18, %19 : vector<8x128xf32>
      %c0_15 = arith.constant 0 : index
      %c0_16 = arith.constant 0 : index
      %21 = vector.load %arg5[%c0_15, %c0_16] : memref<8x128xf32, #tpu.memory_space<vmem>>, vector<8x128xf32>
      tpu.vector_store %arg5[%c0_15, %c0_16], %20 {strides = array<i32>} : memref<8x128xf32, #tpu.memory_space<vmem>>, vector<8x128xf32>,
    } else {
    }
    return
  }
  func.func @transform_0(%arg0: i32, %arg1: i32) -> (i32, i32) {
    %c0_i32 = arith.constant 0 : i32
    return %arg0, %arg1 : i32, i32
  }
  func.func @transform_1(%arg0: i32, %arg1: i32) -> (i32, i32) {
    %c0_i32 = arith.constant 0 : i32
    %c0_i32_0 = arith.constant 0 : i32
    return %arg1, %c0_i32 : i32, i32
  }
  func.func @transform_2(%arg0: i32, %arg1: i32) -> (i32, i32) {
    %c0_i32 = arith.constant 0 : i32
    %c0_i32_0 = arith.constant 0 : i32
    %c0_i32_1 = arith.constant 0 : i32
    return %c0_i32, %c0_i32_0 : i32, i32
  }
  func.func @transform_3(%arg0: i32, %arg1: i32) -> (i32, i32) {
    %c0_i32 = arith.constant 0 : i32
    %c0_i32_0 = arith.constant 0 : i32
    return %arg0, %c0_i32 : i32, i32
  }
}

</mosaic_0001>

<llo_original>
// kernel: network_forward.8
$region0: #{network_forward.8}
  #allocation0 [shape = 'u32[]', space=smem, size = 0x4, offset = 0x4, fixed_abs, tag = 'smem constant byte address 0x4 - core index']
  #allocation1 [shape = 'u32[72,128]{1,0:T(1,128)}', space=vmem, size = 0x9000, scoped, tag = 'internal scratch']
  #allocation2 [shape = 'f32[8,128]{1,0:T(8,128)}', space=vmem, size = 0x1000, scoped, tag = 'scratch operand']
  %s0 = inlined_call_operand.vmem [shape: bf16[8,2560], index: 0, kind: input, shape index: {}]
  %s1 = inlined_call_operand.vmem [shape: bf16[2560,128], index: 1, kind: input, shape index: {}]
  %s2 = inlined_call_operand.vmem [shape: f32[1,128], index: 2, kind: input, shape index: {}]
  %s3 = inlined_call_operand.vmem [shape: bf16[8,128], index: 3, kind: output, shape index: {}]
  %s4 = sld [smem:[#allocation0]]
  $region53: #{network_forward.8} parent=0
    _
  %s6 = ssub.s32 1, %s4
  %s7 = scalar_select 0, %s6, %s4
  loop: start=0, step=1, limit=7
  $region2: #{network_forward.8} parent=0 // loop_pre_header
    _
  $region3: #{network_forward.8} parent=0 // loop_header
    %s9 = sphi 0, %s13
    %p10 = scmp.ge.s32.totalorder %s9, 7
    %s16 = sphi 0, %s28
    %s17 = sphi 0, %s24
    %s18 = sphi 0, %s16
    %s19 = sphi 0, %s17
    %s20 = sphi 0, %s18
    %s21 = sphi 0, %s19
    %s33 = sphi 0, %s35
    %s36 = sphi 0, %s33
    %s37 = sphi 0, %s36
    %s53 = sphi 0, %s37
    %s59 = sphi 0, %s61
    %s62 = sphi 0, %s59
    %s63 = sphi 0, %s62
    %s79 = sphi 0, %s63
    %s83 = sphi 0, %s83
    %s85 = sphi 0, %s83
    %s86 = sphi 0, %s85
    %s100 = sphi 0, %s86
    %s106 = sphi 0, %s108
    %s109 = sphi 0, %s106
    %s110 = sphi 0, %s109
    %s126 = sphi 0, %s110
  $region4: #{network_forward.8} parent=0 // loop_header_branch
    %12 = sbr.rel (%p10) target = $region8
  $region5: #{network_forward.8} parent=0 // loop_body
    %s14 = ssub.s32 %s9, 1
    %s15 = ssub.s32 %s9, 2
    %s22 = sadd.s32 1, %s17
    %p23 = scmp.ge.s32.totalorder %s22, 5
    %s24 = scalar_select %p23, 0, %s22
    %s25 = sadd.s32 1, %s16
    %s26 = scalar_select %p23, %s25, %s16
    %p27 = scmp.ge.s32.totalorder %s26, 1
    %s28 = scalar_select %p27, 0, %s26
    %s29 = ssub.s32 %s16, %s28
    %s30 = ssub.s32 %s17, %s24
    %s31 = sor.u32 %s29, %s30
    %p32 = scmp.eq.s32.totalorder %s31, 0
    %s34 = sadd.s32 %s33, 1
    %s35 = scalar_select %p32, %s33, %s34
    %p38 = pneg %p32
    %p39 = scmp.eq.s32.totalorder %s9, 4
    %p40 = por %p38, %p39
    %p41 = scmp.ne.s32.totalorder %s33, %s36
    %p42 = scmp.eq.s32.totalorder %s9, 0
    %p43 = por %p41, %p42
    %p44 = scmp.ne.s32.totalorder %s33, %s36
    %p45 = scmp.eq.s32.totalorder %s14, 4
    %p46 = por %p44, %p45
    %p47 = scmp.ne.s32.totalorder %s36, %s37
    %p48 = scmp.eq.s32.totalorder %s14, 0
    %p49 = por %p47, %p48
    %p50 = scmp.ne.s32.totalorder %s36, %s37
    %p51 = scmp.eq.s32.totalorder %s15, 4
    %p52 = por %p50, %p51
    %p54 = scmp.ne.s32.totalorder %s37, %s53
    %p55 = scmp.eq.s32.totalorder %s15, 0
    %p56 = por %p54, %p55
    %s57 = ssub.s32 %s17, %s24
    %p58 = scmp.eq.s32.totalorder %s57, 0
    %s60 = sadd.s32 %s59, 1
    %s61 = scalar_select %p58, %s59, %s60
    %p64 = pneg %p58
    %p65 = scmp.eq.s32.totalorder %s9, 4
    %p66 = por %p64, %p65
    %p67 = scmp.ne.s32.totalorder %s59, %s62
    %p68 = scmp.eq.s32.totalorder %s9, 0
    %p69 = por %p67, %p68
    %p70 = scmp.ne.s32.totalorder %s59, %s62
    %p71 = scmp.eq.s32.totalorder %s14, 4
    %p72 = por %p70, %p71
    %p73 = scmp.ne.s32.totalorder %s62, %s63
    %p74 = scmp.eq.s32.totalorder %s14, 0
    %p75 = por %p73, %p74
    %p76 = scmp.ne.s32.totalorder %s62, %s63
    %p77 = scmp.eq.s32.totalorder %s15, 4
    %p78 = por %p76, %p77
    %p80 = scmp.ne.s32.totalorder %s63, %s79
    %p81 = scmp.eq.s32.totalorder %s15, 0
    %p82 = por %p80, %p81
    %s84 = sadd.s32 %s83, 1
    %p87 = scmp.eq.s32.totalorder %s9, 4
    %p88 = scmp.ne.s32.totalorder %s83, %s85
    %p89 = scmp.eq.s32.totalorder %s9, 0
    %p90 = por %p88, %p89
    %p91 = scmp.ne.s32.totalorder %s83, %s85
    %p92 = scmp.eq.s32.totalorder %s14, 4
    %p93 = por %p91, %p92
    %p94 = scmp.ne.s32.totalorder %s85, %s86
    %p95 = scmp.eq.s32.totalorder %s14, 0
    %p96 = por %p94, %p95
    %p97 = scmp.ne.s32.totalorder %s85, %s86
    %p98 = scmp.eq.s32.totalorder %s15, 4
    %p99 = por %p97, %p98
    %p101 = scmp.ne.s32.totalorder %s86, %s100
    %p102 = scmp.eq.s32.totalorder %s15, 0
    %p103 = por %p101, %p102
    %s104 = ssub.s32 %s16, %s28
    %p105 = scmp.eq.s32.totalorder %s104, 0
    %s107 = sadd.s32 %s106, 1
    %s108 = scalar_select %p105, %s106, %s107
    %p111 = pneg %p105
    %p112 = scmp.eq.s32.totalorder %s9, 4
    %p113 = por %p111, %p112
    %p114 = scmp.ne.s32.totalorder %s106, %s109
    %p115 = scmp.eq.s32.totalorder %s9, 0
    %p116 = por %p114, %p115
    %p117 = scmp.ne.s32.totalorder %s106, %s109
    %p118 = scmp.eq.s32.totalorder %s14, 4
    %p119 = por %p117, %p118
    %p120 = scmp.ne.s32.totalorder %s109, %s110
    %p121 = scmp.eq.s32.totalorder %s14, 0
    %p122 = por %p120, %p121
    %p123 = scmp.ne.s32.totalorder %s109, %s110
    %p124 = scmp.eq.s32.totalorder %s15, 4
    %p125 = por %p123, %p124
    %p127 = scmp.ne.s32.totalorder %s110, %s126
    %p128 = scmp.eq.s32.totalorder %s15, 0
    %p129 = por %p127, %p128
    %p130 = scmp.le.s32.totalorder 1, %s9
    %p131 = scmp.lt.s32.totalorder %s9, 6
    %p132 = pnand %p130, %p131
    %p133 = pneg %p132
    // Predicated region
    $region9: #{network_forward.8} parent=5 // pred_check
      _
    $region10: #{network_forward.8} parent=5 // pred_check_branch
      %135 = sbr.rel (%p132) target = $region12
    $region11: #{network_forward.8} parent=5 // pred_region
      %s136 = ssub.s32 %s9, 1
      // Predicated region
      $region13: #{network_forward.8} parent=11 // pred_check
        %p137 = pneg %p96
      $region14: #{network_forward.8} parent=11 // pred_check_branch
        %139 = sbr.rel (%p137) target = $region16
      $region15: #{network_forward.8} parent=11 // pred_region
        _
      $region16: #{network_forward.8} parent=11 // pred_fallthru
        _
    $region12: #{network_forward.8} parent=5 // pred_fallthru
      _
    %p140 = scmp.lt.s32.totalorder %s9, 5
    // Predicated region
    $region17: #{network_forward.8} parent=5 // pred_check
      %p141 = pneg %p140
    $region18: #{network_forward.8} parent=5 // pred_check_branch
      %143 = sbr.rel (%p141) target = $region20
    $region19: #{network_forward.8} parent=5 // pred_region
      // Predicated region
      $region21: #{network_forward.8} parent=19 // pred_check
        %p144 = pneg %p43
      $region22: #{network_forward.8} parent=19 // pred_check_branch
        %146 = sbr.rel (%p144) target = $region24
      $region23: #{network_forward.8} parent=19 // pred_region
        %s147 = smul.u32 4, %s17
        %p148 = scmp.lt.s32.totalorder %s16, 0
        %s149 = scalar_select %p148, %s16, 0
        %p150 = scmp.lt.s32.totalorder %s147, 19
        %s151 = scalar_select %p150, %s147, 19
        %s152 = smul.addr %s149, 20
        %s153 = sadd.s32 %s151, %s152
        %s154 = smul.addr %s153, 4
        %s155 = scalar_lea.vmem %s0, %s154
        %s156 = smul.u32 4, %s17
      $region24: #{network_forward.8} parent=19 // pred_fallthru
        _
      // Predicated region
      $region25: #{network_forward.8} parent=19 // pred_check
        %p157 = pneg %p69
      $region26: #{network_forward.8} parent=19 // pred_check_branch
        %159 = sbr.rel (%p157) target = $region28
      $region27: #{network_forward.8} parent=19 // pred_region
        %s160 = smul.u32 64, %s17
        %p161 = scmp.lt.s32.totalorder %s160, 319
        %s162 = scalar_select %p161, %s160, 319
        %s163 = smul.addr %s162, 4
        %s164 = scalar_lea.vmem %s1, %s163
        %s165 = smul.u32 64, %s17
      $region28: #{network_forward.8} parent=19 // pred_fallthru
        _
    $region20: #{network_forward.8} parent=5 // pred_fallthru
      _
    %p166 = scmp.le.s32.totalorder 1, %s9
    %p167 = scmp.lt.s32.totalorder %s9, 6
    %p168 = pnand %p166, %p167
    %p169 = pneg %p168
    // Predicated region
    $region29: #{network_forward.8} parent=5 // pred_check
      _
    $region30: #{network_forward.8} parent=5 // pred_check_branch
      %171 = sbr.rel (%p168) target = $region32
    $region31: #{network_forward.8} parent=5 // pred_region
      %s172 = ssub.s32 %s9, 1
      %s173 = smul.u32 4, %s19
      %p174 = scmp.lt.s32.totalorder %s18, 0
      %s175 = scalar_select %p174, %s18, 0
      %p176 = scmp.lt.s32.totalorder %s173, 19
      %s177 = scalar_select %p176, %s173, 19
      %s178 = smul.addr %s175, 20
      %s179 = sadd.s32 %s177, %s178
      %s180 = smul.addr %s179, 4
      %s181 = scalar_lea.vmem %s0, %s180
      %p182 = pneg %p49
      %p183 = pneg %p46
      %s184 = smul.u32 64, %s19
      %p185 = scmp.lt.s32.totalorder %s184, 319
      %s186 = scalar_select %p185, %s184, 319
      %s187 = smul.addr %s186, 4
      %s188 = scalar_lea.vmem %s1, %s187
      %p189 = pneg %p75
      %p190 = pneg %p72
      %p191 = pneg %p96
      %p192 = pneg %p93
      %p193 = pneg %p122
      %p194 = pneg %p119
      %p195 = scmp.lt.s32.totalorder %s18, 0
      %s196 = scalar_select %p195, %s18, 0
      %s197 = smul.addr %s196, 4
      %s198 = scalar_lea.vmem %s3, %s197
      %s199 = smul.u32 4, %s19
      %p200 = scmp.lt.s32.totalorder %s18, 0
      %s201 = scalar_select %p200, %s18, 0
      %p202 = scmp.lt.s32.totalorder %s199, 19
      %s203 = scalar_select %p202, %s199, 19
      %s204 = smul.addr %s201, 20
      %s205 = sadd.s32 %s203, %s204
      %s206 = smul.addr %s205, 4
      %s207 = scalar_lea.vmem %s0, %s206
      %s208 = smul.u32 4, %s19
      %s209 = smul.u32 64, %s19
      %p210 = scmp.lt.s32.totalorder %s209, 319
      %s211 = scalar_select %p210, %s209, 319
      %s212 = smul.addr %s211, 4
      %s213 = scalar_lea.vmem %s1, %s212
      %s214 = smul.u32 64, %s19
      %p215 = scmp.lt.s32.totalorder %s18, 0
      %s216 = scalar_select %p215, %s18, 0
      %s217 = smul.addr %s216, 4
      %s218 = scalar_lea.vmem %s3, %s217
      %p219 = scmp.eq.s32.totalorder %s19, 0
      // Predicated region
      $region33: #{network_forward.8} parent=31 // pred_check
        %p220 = pneg %p219
      $region34: #{network_forward.8} parent=31 // pred_check_branch
        %222 = sbr.rel (%p220) target = $region36
      $region35: #{network_forward.8} parent=31 // pred_region
        %223 = vst [vmem:[#allocation2] sm:$0xff] 0.0
      $region36: #{network_forward.8} parent=31 // pred_fallthru
        _
      %v224 = vld [vmem:[#allocation2] sm:$0xff]
      %v225 = vld [vmem:[%s207] sm:$0xff]
      %v226 = vld [vmem:[%s207 + $0x8] sm:$0xff]
      %v227 = vld [vmem:[%s213] sm:$0xf]
      %v228 = vld [vmem:[%s213 + $0x4] sm:$0xf]
      %v229 = vld [vmem:[%s213 + $0x8] sm:$0xf]
      %v230 = vld [vmem:[%s213 + $0xc] sm:$0xf]
      %v231 = vld [vmem:[%s213 + $0x10] sm:$0xf]
      %v232 = vld [vmem:[%s213 + $0x14] sm:$0xf]
      %v233 = vld [vmem:[%s213 + $0x18] sm:$0xf]
      %v234 = vld [vmem:[%s213 + $0x1c] sm:$0xf]
      %v235 = vld [vmem:[%s213 + $0x20] sm:$0xf]
      %v236 = vld [vmem:[%s213 + $0x24] sm:$0xf]
      %v237 = vld [vmem:[%s213 + $0x28] sm:$0xf]
      %v238 = vld [vmem:[%s213 + $0x2c] sm:$0xf]
      %v239 = vld [vmem:[%s213 + $0x30] sm:$0xf]
      %v240 = vld [vmem:[%s213 + $0x34] sm:$0xf]
      %v241 = vld [vmem:[%s213 + $0x38] sm:$0xf]
      %v242 = vld [vmem:[%s213 + $0x3c] sm:$0xf]
      %v243 = vld [vmem:[%s213 + $0x40] sm:$0xf]
      %v244 = vld [vmem:[%s213 + $0x44] sm:$0xf]
      %v245 = vld [vmem:[%s213 + $0x48] sm:$0xf]
      %v246 = vld [vmem:[%s213 + $0x4c] sm:$0xf]
      %v247 = vld [vmem:[%s213 + $0x50] sm:$0xf]
      %v248 = vld [vmem:[%s213 + $0x54] sm:$0xf]
      %v249 = vld [vmem:[%s213 + $0x58] sm:$0xf]
      %v250 = vld [vmem:[%s213 + $0x5c] sm:$0xf]
      %v251 = vld [vmem:[%s213 + $0x60] sm:$0xf]
      %v252 = vld [vmem:[%s213 + $0x64] sm:$0xf]
      %v253 = vld [vmem:[%s213 + $0x68] sm:$0xf]
      %v254 = vld [vmem:[%s213 + $0x6c] sm:$0xf]
      %v255 = vld [vmem:[%s213 + $0x70] sm:$0xf]
      %v256 = vld [vmem:[%s213 + $0x74] sm:$0xf]
      %v257 = vld [vmem:[%s213 + $0x78] sm:$0xf]
      %v258 = vld [vmem:[%s213 + $0x7c] sm:$0xf]
      %v259 = vld [vmem:[%s213 + $0x80] sm:$0xf]
      %v260 = vld [vmem:[%s213 + $0x84] sm:$0xf]
      %v261 = vld [vmem:[%s213 + $0x88] sm:$0xf]
      %v262 = vld [vmem:[%s213 + $0x8c] sm:$0xf]
      %v263 = vld [vmem:[%s213 + $0x90] sm:$0xf]
      %v264 = vld [vmem:[%s213 + $0x94] sm:$0xf]
      %v265 = vld [vmem:[%s213 + $0x98] sm:$0xf]
      %v266 = vld [vmem:[%s213 + $0x9c] sm:$0xf]
      %v267 = vld [vmem:[%s213 + $0xa0] sm:$0xf]
      %v268 = vld [vmem:[%s213 + $0xa4] sm:$0xf]
      %v269 = vld [vmem:[%s213 + $0xa8] sm:$0xf]
      %v270 = vld [vmem:[%s213 + $0xac] sm:$0xf]
      %v271 = vld [vmem:[%s213 + $0xb0] sm:$0xf]
      %v272 = vld [vmem:[%s213 + $0xb4] sm:$0xf]
      %v273 = vld [vmem:[%s213 + $0xb8] sm:$0xf]
      %v274 = vld [vmem:[%s213 + $0xbc] sm:$0xf]
      %v275 = vld [vmem:[%s213 + $0xc0] sm:$0xf]
      %v276 = vld [vmem:[%s213 + $0xc4] sm:$0xf]
      %v277 = vld [vmem:[%s213 + $0xc8] sm:$0xf]
      %v278 = vld [vmem:[%s213 + $0xcc] sm:$0xf]
      %v279 = vld [vmem:[%s213 + $0xd0] sm:$0xf]
      %v280 = vld [vmem:[%s213 + $0xd4] sm:$0xf]
      %v281 = vld [vmem:[%s213 + $0xd8] sm:$0xf]
      %v282 = vld [vmem:[%s213 + $0xdc] sm:$0xf]
      %v283 = vld [vmem:[%s213 + $0xe0] sm:$0xf]
      %v284 = vld [vmem:[%s213 + $0xe4] sm:$0xf]
      %v285 = vld [vmem:[%s213 + $0xe8] sm:$0xf]
      %v286 = vld [vmem:[%s213 + $0xec] sm:$0xf]
      %v287 = vld [vmem:[%s213 + $0xf0] sm:$0xf]
      %v288 = vld [vmem:[%s213 + $0xf4] sm:$0xf]
      %v289 = vld [vmem:[%s213 + $0xf8] sm:$0xf]
      %v290 = vld [vmem:[%s213 + $0xfc] sm:$0xf]
      %v293 = vunpack.c.l.b16 %v225
      %v294 = vunpack.c.h.b16 %v225
      %v295 = vunpack.c.l.b16 %v226
      %v296 = vunpack.c.h.b16 %v226
      %v297 = vpack.c.b16 %v293, %v293
      %v298 = vpack.c.b16 %v294, %v294
      %v299 = vpack.c.b16 %v295, %v295
      %v300 = vpack.c.b16 %v296, %v296
      %v369 = vunpack.c.l.b16 %v227
      %v370 = vunpack.c.l.b16 %v228
      %v371 = vunpack.c.l.b16 %v229
      %v372 = vunpack.c.l.b16 %v230
      %v373 = vunpack.c.l.b16 %v231
      %v374 = vunpack.c.l.b16 %v232
      %v375 = vunpack.c.l.b16 %v233
      %v376 = vunpack.c.l.b16 %v234
      %v377 = vunpack.c.l.b16 %v235
      %v378 = vunpack.c.l.b16 %v236
      %v379 = vunpack.c.l.b16 %v237
      %v380 = vunpack.c.l.b16 %v238
      %v381 = vunpack.c.l.b16 %v239
      %v382 = vunpack.c.l.b16 %v240
      %v383 = vunpack.c.l.b16 %v241
      %v384 = vunpack.c.l.b16 %v242
      %v385 = vunpack.c.l.b16 %v243
      %v386 = vunpack.c.l.b16 %v244
      %v387 = vunpack.c.l.b16 %v245
      %v388 = vunpack.c.l.b16 %v246
      %v389 = vunpack.c.l.b16 %v247
      %v390 = vunpack.c.l.b16 %v248
      %v391 = vunpack.c.l.b16 %v249
      %v392 = vunpack.c.l.b16 %v250
      %v393 = vunpack.c.l.b16 %v251
      %v394 = vunpack.c.l.b16 %v252
      %v395 = vunpack.c.l.b16 %v253
      %v396 = vunpack.c.l.b16 %v254
      %v397 = vunpack.c.l.b16 %v255
      %v398 = vunpack.c.l.b16 %v256
      %v399 = vunpack.c.l.b16 %v257
      %v400 = vunpack.c.l.b16 %v258
      %v401 = vunpack.c.l.b16 %v259
      %v402 = vunpack.c.l.b16 %v260
      %v403 = vunpack.c.l.b16 %v261
      %v404 = vunpack.c.l.b16 %v262
      %v405 = vunpack.c.l.b16 %v263
      %v406 = vunpack.c.l.b16 %v264
      %v407 = vunpack.c.l.b16 %v265
      %v408 = vunpack.c.l.b16 %v266
      %v409 = vunpack.c.l.b16 %v267
      %v410 = vunpack.c.l.b16 %v268
      %v411 = vunpack.c.l.b16 %v269
      %v412 = vunpack.c.l.b16 %v270
      %v413 = vunpack.c.l.b16 %v271
      %v414 = vunpack.c.l.b16 %v272
      %v415 = vunpack.c.l.b16 %v273
      %v416 = vunpack.c.l.b16 %v274
      %v417 = vunpack.c.l.b16 %v275
      %v418 = vunpack.c.l.b16 %v276
      %v419 = vunpack.c.l.b16 %v277
      %v420 = vunpack.c.l.b16 %v278
      %v421 = vunpack.c.l.b16 %v279
      %v422 = vunpack.c.l.b16 %v280
      %v423 = vunpack.c.l.b16 %v281
      %v424 = vunpack.c.l.b16 %v282
      %v425 = vunpack.c.l.b16 %v283
      %v426 = vunpack.c.l.b16 %v284
      %v427 = vunpack.c.l.b16 %v285
      %v428 = vunpack.c.l.b16 %v286
      %v429 = vunpack.c.l.b16 %v287
      %v430 = vunpack.c.l.b16 %v288
      %v431 = vunpack.c.l.b16 %v289
      %v432 = vunpack.c.l.b16 %v290
      %v433 = vpack.c.b16 %v370, %v369
      %v434 = vpack.c.b16 %v372, %v371
      %v435 = vpack.c.b16 %v374, %v373
      %v436 = vpack.c.b16 %v376, %v375
      %v437 = vpack.c.b16 %v378, %v377
      %v438 = vpack.c.b16 %v380, %v379
      %v439 = vpack.c.b16 %v382, %v381
      %v440 = vpack.c.b16 %v384, %v383
      %v441 = vpack.c.b16 %v386, %v385
      %v442 = vpack.c.b16 %v388, %v387
      %v443 = vpack.c.b16 %v390, %v389
      %v444 = vpack.c.b16 %v392, %v391
      %v445 = vpack.c.b16 %v394, %v393
      %v446 = vpack.c.b16 %v396, %v395
      %v447 = vpack.c.b16 %v398, %v397
      %v448 = vpack.c.b16 %v400, %v399
      %v449 = vpack.c.b16 %v402, %v401
      %v450 = vpack.c.b16 %v404, %v403
      %v451 = vpack.c.b16 %v406, %v405
      %v452 = vpack.c.b16 %v408, %v407
      %v453 = vpack.c.b16 %v410, %v409
      %v454 = vpack.c.b16 %v412, %v411
      %v455 = vpack.c.b16 %v414, %v413
      %v456 = vpack.c.b16 %v416, %v415
      %v457 = vpack.c.b16 %v418, %v417
      %v458 = vpack.c.b16 %v420, %v419
      %v459 = vpack.c.b16 %v422, %v421
      %v460 = vpack.c.b16 %v424, %v423
      %v461 = vpack.c.b16 %v426, %v425
      %v462 = vpack.c.b16 %v428, %v427
      %v463 = vpack.c.b16 %v430, %v429
      %v464 = vpack.c.b16 %v432, %v431
      %497 = vmatpush.bf16.msra.mxu0 %v440
      %498 = vmatpush.bf16.msra.mxu0 %v439
      %499 = vmatpush.bf16.msra.mxu0 %v438
      %500 = vmatpush.bf16.msra.mxu0 %v437
      %501 = vmatpush.bf16.msra.mxu0 %v436
      %502 = vmatpush.bf16.msra.mxu0 %v435
      %503 = vmatpush.bf16.msra.mxu0 %v434
      %504 = vmatpush.bf16.msra.mxu0 %v433
      %505 = vmatmul.bf16.gmra.mxu0 %v297
      %v506 = vpop.f32.mrf.mxu0
      %v507 = vadd.f32 0.0, %v506
      %v508 = vpop.f32.mrf.mxu0
      %509 = vdwg.mxu0
      %510 = vmatpush.bf16.msra.mxu0 %v448
      %511 = vmatpush.bf16.msra.mxu0 %v447
      %512 = vmatpush.bf16.msra.mxu0 %v446
      %513 = vmatpush.bf16.msra.mxu0 %v445
      %514 = vmatpush.bf16.msra.mxu0 %v444
      %515 = vmatpush.bf16.msra.mxu0 %v443
      %516 = vmatpush.bf16.msra.mxu0 %v442
      %517 = vmatpush.bf16.msra.mxu0 %v441
      %518 = vmatmul.bf16.gmra.mxu0 %v298
      %v519 = vpop.f32.mrf.mxu0
      %v520 = vadd.f32 %v507, %v519
      %v521 = vpop.f32.mrf.mxu0
      %522 = vdwg.mxu0
      %523 = vmatpush.bf16.msra.mxu0 %v456
      %524 = vmatpush.bf16.msra.mxu0 %v455
      %525 = vmatpush.bf16.msra.mxu0 %v454
      %526 = vmatpush.bf16.msra.mxu0 %v453
      %527 = vmatpush.bf16.msra.mxu0 %v452
      %528 = vmatpush.bf16.msra.mxu0 %v451
      %529 = vmatpush.bf16.msra.mxu0 %v450
      %530 = vmatpush.bf16.msra.mxu0 %v449
      %531 = vmatmul.bf16.gmra.mxu0 %v299
      %v532 = vpop.f32.mrf.mxu0
      %v533 = vadd.f32 %v520, %v532
      %v534 = vpop.f32.mrf.mxu0
      %535 = vdwg.mxu0
      %536 = vmatpush.bf16.msra.mxu0 %v464
      %537 = vmatpush.bf16.msra.mxu0 %v463
      %538 = vmatpush.bf16.msra.mxu0 %v462
      %539 = vmatpush.bf16.msra.mxu0 %v461
      %540 = vmatpush.bf16.msra.mxu0 %v460
      %541 = vmatpush.bf16.msra.mxu0 %v459
      %542 = vmatpush.bf16.msra.mxu0 %v458
      %543 = vmatpush.bf16.msra.mxu0 %v457
      %544 = vmatmul.bf16.gmra.mxu0 %v300
      %v545 = vpop.f32.mrf.mxu0
      %v546 = vadd.f32 %v533, %v545
      %v547 = vpop.f32.mrf.mxu0
      %548 = vdwg.mxu0
      %v549 = vadd.f32 %v224, %v546
      %550 = vst [vmem:[#allocation2] sm:$0xff] %v549
      %p551 = scmp.eq.s32.totalorder %s19, 4
      // Predicated region
      $region37: #{network_forward.8} parent=31 // pred_check
        %p552 = pneg %p551
      $region38: #{network_forward.8} parent=31 // pred_check_branch
        %554 = sbr.rel (%p552) target = $region40
      $region39: #{network_forward.8} parent=31 // pred_region
        %v555 = vld [vmem:[#allocation2] sm:$0xff]
        %v556 = vld [vmem:[%s2] sm:$0x1]
        %v558 = vperm.slane %v556, 0
        %v560 = vadd.f32 %v555, %v558
        %v561 = vmax.f32 %v560, 0.0
        %v562 = vpack.c.bf16 %v561, %v561
        %563 = vst [vmem:[%s218] sm:$0xf] %v562
      $region40: #{network_forward.8} parent=31 // pred_fallthru
        _
      %p564 = scmp.lt.s32.totalorder %s18, 0
      %s565 = scalar_select %p564, %s18, 0
      %s566 = smul.addr %s565, 4
      %s567 = scalar_lea.vmem %s3, %s566
      // Predicated region
      $region41: #{network_forward.8} parent=31 // pred_check
        %p568 = pneg %p119
      $region42: #{network_forward.8} parent=31 // pred_check_branch
        %570 = sbr.rel (%p568) target = $region44
      $region43: #{network_forward.8} parent=31 // pred_region
        _
      $region44: #{network_forward.8} parent=31 // pred_fallthru
        _
      // Predicated region
      $region45: #{network_forward.8} parent=31 // pred_check
        %p571 = pneg %p119
      $region46: #{network_forward.8} parent=31 // pred_check_branch
        %573 = sbr.rel (%p571) target = $region48
      $region47: #{network_forward.8} parent=31 // pred_region
        %p574 = scmp.lt.s32.totalorder %s18, 0
        %s575 = scalar_select %p574, %s18, 0
        %s576 = smul.addr %s575, 4
        %s577 = scalar_lea.vmem %s3, %s576
      $region48: #{network_forward.8} parent=31 // pred_fallthru
        _
    $region32: #{network_forward.8} parent=5 // pred_fallthru
      _
    %p578 = scmp.le.s32.totalorder 2, %s9
    // Predicated region
    $region49: #{network_forward.8} parent=5 // pred_check
      %p579 = pneg %p578
    $region50: #{network_forward.8} parent=5 // pred_check_branch
      %581 = sbr.rel (%p579) target = $region52
    $region51: #{network_forward.8} parent=5 // pred_region
      %s582 = ssub.s32 %s9, 2
    $region52: #{network_forward.8} parent=5 // pred_fallthru
      _
  $region6: #{network_forward.8} parent=0 // loop_footer
    %s13 = sadd.s32 1, %s9
  $region7: #{network_forward.8} parent=0 // loop_footer_branch
    %8 = sbr.rel target = $region3
  $region8: #{network_forward.8} parent=0 // loop_exit
    _

// kernel: network_forward.9
$region0: #{network_forward.9}
  #allocation0 [shape = 'u32[]', space=smem, size = 0x4, offset = 0x4, fixed_abs, tag = 'smem constant byte address 0x4 - core index']
  #allocation1 [shape = 'u32[72,128]{1,0:T(1,128)}', space=vmem, size = 0x9000, scoped, tag = 'internal scratch']
  #allocation2 [shape = 'f32[8,256]{1,0:T(8,128)}', space=vmem, size = 0x2000, scoped, tag = 'scratch operand']
  %s0 = inlined_call_operand.vmem [shape: bf16[8,128], index: 0, kind: input, shape index: {}]
  %s1 = inlined_call_operand.vmem [shape: bf16[128,256], index: 1, kind: input, shape index: {}]
  %s2 = inlined_call_operand.vmem [shape: f32[1,256], index: 2, kind: input, shape index: {}]
  %s3 = inlined_call_operand.vmem [shape: f32[8,256], index: 3, kind: output, shape index: {}]
  %s4 = sld [smem:[#allocation0]]
  $region30: #{network_forward.9} parent=0
    _
  %s6 = ssub.s32 1, %s4
  %s7 = scalar_select 0, %s6, %s4
  // Predicated region
  $region2: #{network_forward.9} parent=0 // pred_check
    _
  $region3: #{network_forward.9} parent=0 // pred_check_branch
    %9 = sbr.rel (0) target = $region5
  $region4: #{network_forward.9} parent=0 // pred_region
    _
  $region5: #{network_forward.9} parent=0 // pred_fallthru
    _
  // Predicated region
  $region6: #{network_forward.9} parent=0 // pred_check
    _
  $region7: #{network_forward.9} parent=0 // pred_check_branch
    %11 = sbr.rel (0) target = $region9
  $region8: #{network_forward.9} parent=0 // pred_region
    _
  $region9: #{network_forward.9} parent=0 // pred_fallthru
    _
  // Predicated region
  $region10: #{network_forward.9} parent=0 // pred_check
    _
  $region11: #{network_forward.9} parent=0 // pred_check_branch
    %13 = sbr.rel (0) target = $region13
  $region12: #{network_forward.9} parent=0 // pred_region
    _
  $region13: #{network_forward.9} parent=0 // pred_fallthru
    _
  %p14 = scmp.eq.s32.totalorder 0, 0
  // Predicated region
  $region14: #{network_forward.9} parent=0 // pred_check
    %p15 = pneg %p14
  $region15: #{network_forward.9} parent=0 // pred_check_branch
    %17 = sbr.rel (%p15) target = $region17
  $region16: #{network_forward.9} parent=0 // pred_region
    %18 = vst [vmem:[#allocation2] sm:$0xff] 0.0
    %19 = vst [vmem:[#allocation2 + $0x8] sm:$0xff] 0.0
  $region17: #{network_forward.9} parent=0 // pred_fallthru
    _
  %v20 = vld [vmem:[#allocation2] sm:$0xff]
  %v21 = vld [vmem:[#allocation2 + $0x8] sm:$0xff]
  %v22 = vld [vmem:[%s0] sm:$0xf]
  %v23 = vld [vmem:[%s1] sm:$0xff]
  %v24 = vld [vmem:[%s1 + $0x8] sm:$0xff]
  %v25 = vld [vmem:[%s1 + $0x10] sm:$0xff]
  %v26 = vld [vmem:[%s1 + $0x18] sm:$0xff]
  %v27 = vld [vmem:[%s1 + $0x20] sm:$0xff]
  %v28 = vld [vmem:[%s1 + $0x28] sm:$0xff]
  %v29 = vld [vmem:[%s1 + $0x30] sm:$0xff]
  %v30 = vld [vmem:[%s1 + $0x38] sm:$0xff]
  %v31 = vld [vmem:[%s1 + $0x40] sm:$0xff]
  %v32 = vld [vmem:[%s1 + $0x48] sm:$0xff]
  %v33 = vld [vmem:[%s1 + $0x50] sm:$0xff]
  %v34 = vld [vmem:[%s1 + $0x58] sm:$0xff]
  %v35 = vld [vmem:[%s1 + $0x60] sm:$0xff]
  %v36 = vld [vmem:[%s1 + $0x68] sm:$0xff]
  %v37 = vld [vmem:[%s1 + $0x70] sm:$0xff]
  %v38 = vld [vmem:[%s1 + $0x78] sm:$0xff]
  %v55 = vunpack.c.l.b16 %v23
  %v56 = vunpack.c.h.b16 %v23
  %v57 = vunpack.c.l.b16 %v24
  %v58 = vunpack.c.h.b16 %v24
  %v59 = vunpack.c.l.b16 %v25
  %v60 = vunpack.c.h.b16 %v25
  %v61 = vunpack.c.l.b16 %v26
  %v62 = vunpack.c.h.b16 %v26
  %v63 = vunpack.c.l.b16 %v27
  %v64 = vunpack.c.h.b16 %v27
  %v65 = vunpack.c.l.b16 %v28
  %v66 = vunpack.c.h.b16 %v28
  %v67 = vunpack.c.l.b16 %v29
  %v68 = vunpack.c.h.b16 %v29
  %v69 = vunpack.c.l.b16 %v30
  %v70 = vunpack.c.h.b16 %v30
  %v71 = vunpack.c.l.b16 %v31
  %v72 = vunpack.c.h.b16 %v31
  %v73 = vunpack.c.l.b16 %v32
  %v74 = vunpack.c.h.b16 %v32
  %v75 = vunpack.c.l.b16 %v33
  %v76 = vunpack.c.h.b16 %v33
  %v77 = vunpack.c.l.b16 %v34
  %v78 = vunpack.c.h.b16 %v34
  %v79 = vunpack.c.l.b16 %v35
  %v80 = vunpack.c.h.b16 %v35
  %v81 = vunpack.c.l.b16 %v36
  %v82 = vunpack.c.h.b16 %v36
  %v83 = vunpack.c.l.b16 %v37
  %v84 = vunpack.c.h.b16 %v37
  %v85 = vunpack.c.l.b16 %v38
  %v86 = vunpack.c.h.b16 %v38
  %v87 = vpack.c.b16 %v57, %v55
  %v88 = vpack.c.b16 %v58, %v56
  %v89 = vpack.c.b16 %v61, %v59
  %v90 = vpack.c.b16 %v62, %v60
  %v91 = vpack.c.b16 %v65, %v63
  %v92 = vpack.c.b16 %v66, %v64
  %v93 = vpack.c.b16 %v69, %v67
  %v94 = vpack.c.b16 %v70, %v68
  %v95 = vpack.c.b16 %v73, %v71
  %v96 = vpack.c.b16 %v74, %v72
  %v97 = vpack.c.b16 %v77, %v75
  %v98 = vpack.c.b16 %v78, %v76
  %v99 = vpack.c.b16 %v81, %v79
  %v100 = vpack.c.b16 %v82, %v80
  %v101 = vpack.c.b16 %v85, %v83
  %v102 = vpack.c.b16 %v86, %v84
  %119 = vmatpush.bf16.msra.mxu0 %v101
  %120 = vmatpush.bf16.msra.mxu0 %v99
  %121 = vmatpush.bf16.msra.mxu0 %v97
  %122 = vmatpush.bf16.msra.mxu0 %v95
  %123 = vmatpush.bf16.msra.mxu0 %v93
  %124 = vmatpush.bf16.msra.mxu0 %v91
  %125 = vmatpush.bf16.msra.mxu0 %v89
  %126 = vmatpush.bf16.msra.mxu0 %v87
  %127 = vmatmul.bf16.gmra.mxu0 %v22
  %v128 = vpop.f32.mrf.mxu0
  %v129 = vadd.f32 0.0, %v128
  %v130 = vpop.f32.mrf.mxu0
  %131 = vdwg.mxu0
  %132 = vmatpush.bf16.msra.mxu0 %v102
  %133 = vmatpush.bf16.msra.mxu0 %v100
  %134 = vmatpush.bf16.msra.mxu0 %v98
  %135 = vmatpush.bf16.msra.mxu0 %v96
  %136 = vmatpush.bf16.msra.mxu0 %v94
  %137 = vmatpush.bf16.msra.mxu0 %v92
  %138 = vmatpush.bf16.msra.mxu0 %v90
  %139 = vmatpush.bf16.msra.mxu0 %v88
  %140 = vmatmul.bf16.gmra.mxu0 %v22
  %v141 = vpop.f32.mrf.mxu0
  %v142 = vadd.f32 0.0, %v141
  %v143 = vpop.f32.mrf.mxu0
  %144 = vdwg.mxu0
  %v145 = vadd.f32 %v20, %v129
  %v146 = vadd.f32 %v21, %v142
  %147 = vst [vmem:[#allocation2] sm:$0xff] %v145
  %148 = vst [vmem:[#allocation2 + $0x8] sm:$0xff] %v146
  // Predicated region
  $region18: #{network_forward.9} parent=0 // pred_check
    %p149 = pneg %p14
  $region19: #{network_forward.9} parent=0 // pred_check_branch
    %151 = sbr.rel (%p149) target = $region21
  $region20: #{network_forward.9} parent=0 // pred_region
    %v152 = vld [vmem:[#allocation2] sm:$0xff]
    %v153 = vld [vmem:[#allocation2 + $0x8] sm:$0xff]
    %v154 = vld [vmem:[%s2] sm:$0x3]
    %v156 = vperm.slane %v154, 0
    %v157 = vperm.slane %v154, 1
    %v160 = vadd.f32 %v152, %v156
    %v161 = vadd.f32 %v153, %v157
    %162 = vst [vmem:[%s3] sm:$0xff] %v160
    %163 = vst [vmem:[%s3 + $0x8] sm:$0xff] %v161
  $region21: #{network_forward.9} parent=0 // pred_fallthru
    _
  // Predicated region
  $region22: #{network_forward.9} parent=0 // pred_check
    _
  $region23: #{network_forward.9} parent=0 // pred_check_branch
    %165 = sbr.rel (0) target = $region25
  $region24: #{network_forward.9} parent=0 // pred_region
    _
  $region25: #{network_forward.9} parent=0 // pred_fallthru
    _
  // Predicated region
  $region26: #{network_forward.9} parent=0 // pred_check
    _
  $region27: #{network_forward.9} parent=0 // pred_check_branch
    %167 = sbr.rel (0) target = $region29
  $region28: #{network_forward.9} parent=0 // pred_region
    _
  $region29: #{network_forward.9} parent=0 // pred_fallthru
    _

// kernel: network_forward.10
$region0: #{network_forward.10}
  #allocation0 [shape = 'u32[]', space=smem, size = 0x4, offset = 0x4, fixed_abs, tag = 'smem constant byte address 0x4 - core index']
  #allocation1 [shape = 'u32[72,128]{1,0:T(1,128)}', space=vmem, size = 0x9000, scoped, tag = 'internal scratch']
  #allocation2 [shape = 'f32[8,128]{1,0:T(8,128)}', space=vmem, size = 0x1000, scoped, tag = 'scratch operand']
  %s0 = inlined_call_operand.vmem [shape: bf16[8,1536], index: 0, kind: input, shape index: {}]
  %s1 = inlined_call_operand.vmem [shape: bf16[1536,128], index: 1, kind: input, shape index: {}]
  %s2 = inlined_call_operand.vmem [shape: f32[1,128], index: 2, kind: input, shape index: {}]
  %s3 = inlined_call_operand.vmem [shape: bf16[8,128], index: 3, kind: output, shape index: {}]
  %s4 = sld [smem:[#allocation0]]
  $region53: #{network_forward.10} parent=0
    _
  %s6 = ssub.s32 1, %s4
  %s7 = scalar_select 0, %s6, %s4
  loop: start=0, step=1, limit=5
  $region2: #{network_forward.10} parent=0 // loop_pre_header
    _
  $region3: #{network_forward.10} parent=0 // loop_header
    %s9 = sphi 0, %s13
    %p10 = scmp.ge.s32.totalorder %s9, 5
    %s16 = sphi 0, %s28
    %s17 = sphi 0, %s24
    %s18 = sphi 0, %s16
    %s19 = sphi 0, %s17
    %s20 = sphi 0, %s18
    %s21 = sphi 0, %s19
    %s33 = sphi 0, %s35
    %s36 = sphi 0, %s33
    %s37 = sphi 0, %s36
    %s53 = sphi 0, %s37
    %s59 = sphi 0, %s61
    %s62 = sphi 0, %s59
    %s63 = sphi 0, %s62
    %s79 = sphi 0, %s63
    %s83 = sphi 0, %s83
    %s85 = sphi 0, %s83
    %s86 = sphi 0, %s85
    %s100 = sphi 0, %s86
    %s106 = sphi 0, %s108
    %s109 = sphi 0, %s106
    %s110 = sphi 0, %s109
    %s126 = sphi 0, %s110
  $region4: #{network_forward.10} parent=0 // loop_header_branch
    %12 = sbr.rel (%p10) target = $region8
  $region5: #{network_forward.10} parent=0 // loop_body
    %s14 = ssub.s32 %s9, 1
    %s15 = ssub.s32 %s9, 2
    %s22 = sadd.s32 1, %s17
    %p23 = scmp.ge.s32.totalorder %s22, 3
    %s24 = scalar_select %p23, 0, %s22
    %s25 = sadd.s32 1, %s16
    %s26 = scalar_select %p23, %s25, %s16
    %p27 = scmp.ge.s32.totalorder %s26, 1
    %s28 = scalar_select %p27, 0, %s26
    %s29 = ssub.s32 %s16, %s28
    %s30 = ssub.s32 %s17, %s24
    %s31 = sor.u32 %s29, %s30
    %p32 = scmp.eq.s32.totalorder %s31, 0
    %s34 = sadd.s32 %s33, 1
    %s35 = scalar_select %p32, %s33, %s34
    %p38 = pneg %p32
    %p39 = scmp.eq.s32.totalorder %s9, 2
    %p40 = por %p38, %p39
    %p41 = scmp.ne.s32.totalorder %s33, %s36
    %p42 = scmp.eq.s32.totalorder %s9, 0
    %p43 = por %p41, %p42
    %p44 = scmp.ne.s32.totalorder %s33, %s36
    %p45 = scmp.eq.s32.totalorder %s14, 2
    %p46 = por %p44, %p45
    %p47 = scmp.ne.s32.totalorder %s36, %s37
    %p48 = scmp.eq.s32.totalorder %s14, 0
    %p49 = por %p47, %p48
    %p50 = scmp.ne.s32.totalorder %s36, %s37
    %p51 = scmp.eq.s32.totalorder %s15, 2
    %p52 = por %p50, %p51
    %p54 = scmp.ne.s32.totalorder %s37, %s53
    %p55 = scmp.eq.s32.totalorder %s15, 0
    %p56 = por %p54, %p55
    %s57 = ssub.s32 %s17, %s24
    %p58 = scmp.eq.s32.totalorder %s57, 0
    %s60 = sadd.s32 %s59, 1
    %s61 = scalar_select %p58, %s59, %s60
    %p64 = pneg %p58
    %p65 = scmp.eq.s32.totalorder %s9, 2
    %p66 = por %p64, %p65
    %p67 = scmp.ne.s32.totalorder %s59, %s62
    %p68 = scmp.eq.s32.totalorder %s9, 0
    %p69 = por %p67, %p68
    %p70 = scmp.ne.s32.totalorder %s59, %s62
    %p71 = scmp.eq.s32.totalorder %s14, 2
    %p72 = por %p70, %p71
    %p73 = scmp.ne.s32.totalorder %s62, %s63
    %p74 = scmp.eq.s32.totalorder %s14, 0
    %p75 = por %p73, %p74
    %p76 = scmp.ne.s32.totalorder %s62, %s63
    %p77 = scmp.eq.s32.totalorder %s15, 2
    %p78 = por %p76, %p77
    %p80 = scmp.ne.s32.totalorder %s63, %s79
    %p81 = scmp.eq.s32.totalorder %s15, 0
    %p82 = por %p80, %p81
    %s84 = sadd.s32 %s83, 1
    %p87 = scmp.eq.s32.totalorder %s9, 2
    %p88 = scmp.ne.s32.totalorder %s83, %s85
    %p89 = scmp.eq.s32.totalorder %s9, 0
    %p90 = por %p88, %p89
    %p91 = scmp.ne.s32.totalorder %s83, %s85
    %p92 = scmp.eq.s32.totalorder %s14, 2
    %p93 = por %p91, %p92
    %p94 = scmp.ne.s32.totalorder %s85, %s86
    %p95 = scmp.eq.s32.totalorder %s14, 0
    %p96 = por %p94, %p95
    %p97 = scmp.ne.s32.totalorder %s85, %s86
    %p98 = scmp.eq.s32.totalorder %s15, 2
    %p99 = por %p97, %p98
    %p101 = scmp.ne.s32.totalorder %s86, %s100
    %p102 = scmp.eq.s32.totalorder %s15, 0
    %p103 = por %p101, %p102
    %s104 = ssub.s32 %s16, %s28
    %p105 = scmp.eq.s32.totalorder %s104, 0
    %s107 = sadd.s32 %s106, 1
    %s108 = scalar_select %p105, %s106, %s107
    %p111 = pneg %p105
    %p112 = scmp.eq.s32.totalorder %s9, 2
    %p113 = por %p111, %p112
    %p114 = scmp.ne.s32.totalorder %s106, %s109
    %p115 = scmp.eq.s32.totalorder %s9, 0
    %p116 = por %p114, %p115
    %p117 = scmp.ne.s32.totalorder %s106, %s109
    %p118 = scmp.eq.s32.totalorder %s14, 2
    %p119 = por %p117, %p118
    %p120 = scmp.ne.s32.totalorder %s109, %s110
    %p121 = scmp.eq.s32.totalorder %s14, 0
    %p122 = por %p120, %p121
    %p123 = scmp.ne.s32.totalorder %s109, %s110
    %p124 = scmp.eq.s32.totalorder %s15, 2
    %p125 = por %p123, %p124
    %p127 = scmp.ne.s32.totalorder %s110, %s126
    %p128 = scmp.eq.s32.totalorder %s15, 0
    %p129 = por %p127, %p128
    %p130 = scmp.le.s32.totalorder 1, %s9
    %p131 = scmp.lt.s32.totalorder %s9, 4
    %p132 = pnand %p130, %p131
    %p133 = pneg %p132
    // Predicated region
    $region9: #{network_forward.10} parent=5 // pred_check
      _
    $region10: #{network_forward.10} parent=5 // pred_check_branch
      %135 = sbr.rel (%p132) target = $region12
    $region11: #{network_forward.10} parent=5 // pred_region
      %s136 = ssub.s32 %s9, 1
      // Predicated region
      $region13: #{network_forward.10} parent=11 // pred_check
        %p137 = pneg %p96
      $region14: #{network_forward.10} parent=11 // pred_check_branch
        %139 = sbr.rel (%p137) target = $region16
      $region15: #{network_forward.10} parent=11 // pred_region
        _
      $region16: #{network_forward.10} parent=11 // pred_fallthru
        _
    $region12: #{network_forward.10} parent=5 // pred_fallthru
      _
    %p140 = scmp.lt.s32.totalorder %s9, 3
    // Predicated region
    $region17: #{network_forward.10} parent=5 // pred_check
      %p141 = pneg %p140
    $region18: #{network_forward.10} parent=5 // pred_check_branch
      %143 = sbr.rel (%p141) target = $region20
    $region19: #{network_forward.10} parent=5 // pred_region
      // Predicated region
      $region21: #{network_forward.10} parent=19 // pred_check
        %p144 = pneg %p43
      $region22: #{network_forward.10} parent=19 // pred_check_branch
        %146 = sbr.rel (%p144) target = $region24
      $region23: #{network_forward.10} parent=19 // pred_region
        %s147 = smul.u32 4, %s17
        %p148 = scmp.lt.s32.totalorder %s16, 0
        %s149 = scalar_select %p148, %s16, 0
        %p150 = scmp.lt.s32.totalorder %s147, 11
        %s151 = scalar_select %p150, %s147, 11
        %s152 = smul.addr %s149, 12
        %s153 = sadd.s32 %s151, %s152
        %s154 = smul.addr %s153, 4
        %s155 = scalar_lea.vmem %s0, %s154
        %s156 = smul.u32 4, %s17
      $region24: #{network_forward.10} parent=19 // pred_fallthru
        _
      // Predicated region
      $region25: #{network_forward.10} parent=19 // pred_check
        %p157 = pneg %p69
      $region26: #{network_forward.10} parent=19 // pred_check_branch
        %159 = sbr.rel (%p157) target = $region28
      $region27: #{network_forward.10} parent=19 // pred_region
        %s160 = smul.u32 64, %s17
        %p161 = scmp.lt.s32.totalorder %s160, 191
        %s162 = scalar_select %p161, %s160, 191
        %s163 = smul.addr %s162, 4
        %s164 = scalar_lea.vmem %s1, %s163
        %s165 = smul.u32 64, %s17
      $region28: #{network_forward.10} parent=19 // pred_fallthru
        _
    $region20: #{network_forward.10} parent=5 // pred_fallthru
      _
    %p166 = scmp.le.s32.totalorder 1, %s9
    %p167 = scmp.lt.s32.totalorder %s9, 4
    %p168 = pnand %p166, %p167
    %p169 = pneg %p168
    // Predicated region
    $region29: #{network_forward.10} parent=5 // pred_check
      _
    $region30: #{network_forward.10} parent=5 // pred_check_branch
      %171 = sbr.rel (%p168) target = $region32
    $region31: #{network_forward.10} parent=5 // pred_region
      %s172 = ssub.s32 %s9, 1
      %s173 = smul.u32 4, %s19
      %p174 = scmp.lt.s32.totalorder %s18, 0
      %s175 = scalar_select %p174, %s18, 0
      %p176 = scmp.lt.s32.totalorder %s173, 11
      %s177 = scalar_select %p176, %s173, 11
      %s178 = smul.addr %s175, 12
      %s179 = sadd.s32 %s177, %s178
      %s180 = smul.addr %s179, 4
      %s181 = scalar_lea.vmem %s0, %s180
      %p182 = pneg %p49
      %p183 = pneg %p46
      %s184 = smul.u32 64, %s19
      %p185 = scmp.lt.s32.totalorder %s184, 191
      %s186 = scalar_select %p185, %s184, 191
      %s187 = smul.addr %s186, 4
      %s188 = scalar_lea.vmem %s1, %s187
      %p189 = pneg %p75
      %p190 = pneg %p72
      %p191 = pneg %p96
      %p192 = pneg %p93
      %p193 = pneg %p122
      %p194 = pneg %p119
      %p195 = scmp.lt.s32.totalorder %s18, 0
      %s196 = scalar_select %p195, %s18, 0
      %s197 = smul.addr %s196, 4
      %s198 = scalar_lea.vmem %s3, %s197
      %s199 = smul.u32 4, %s19
      %p200 = scmp.lt.s32.totalorder %s18, 0
      %s201 = scalar_select %p200, %s18, 0
      %p202 = scmp.lt.s32.totalorder %s199, 11
      %s203 = scalar_select %p202, %s199, 11
      %s204 = smul.addr %s201, 12
      %s205 = sadd.s32 %s203, %s204
      %s206 = smul.addr %s205, 4
      %s207 = scalar_lea.vmem %s0, %s206
      %s208 = smul.u32 4, %s19
      %s209 = smul.u32 64, %s19
      %p210 = scmp.lt.s32.totalorder %s209, 191
      %s211 = scalar_select %p210, %s209, 191
      %s212 = smul.addr %s211, 4
      %s213 = scalar_lea.vmem %s1, %s212
      %s214 = smul.u32 64, %s19
      %p215 = scmp.lt.s32.totalorder %s18, 0
      %s216 = scalar_select %p215, %s18, 0
      %s217 = smul.addr %s216, 4
      %s218 = scalar_lea.vmem %s3, %s217
      %p219 = scmp.eq.s32.totalorder %s19, 0
      // Predicated region
      $region33: #{network_forward.10} parent=31 // pred_check
        %p220 = pneg %p219
      $region34: #{network_forward.10} parent=31 // pred_check_branch
        %222 = sbr.rel (%p220) target = $region36
      $region35: #{network_forward.10} parent=31 // pred_region
        %223 = vst [vmem:[#allocation2] sm:$0xff] 0.0
      $region36: #{network_forward.10} parent=31 // pred_fallthru
        _
      %v224 = vld [vmem:[#allocation2] sm:$0xff]
      %v225 = vld [vmem:[%s207] sm:$0xff]
      %v226 = vld [vmem:[%s207 + $0x8] sm:$0xff]
      %v227 = vld [vmem:[%s213] sm:$0xf]
      %v228 = vld [vmem:[%s213 + $0x4] sm:$0xf]
      %v229 = vld [vmem:[%s213 + $0x8] sm:$0xf]
      %v230 = vld [vmem:[%s213 + $0xc] sm:$0xf]
      %v231 = vld [vmem:[%s213 + $0x10] sm:$0xf]
      %v232 = vld [vmem:[%s213 + $0x14] sm:$0xf]
      %v233 = vld [vmem:[%s213 + $0x18] sm:$0xf]
      %v234 = vld [vmem:[%s213 + $0x1c] sm:$0xf]
      %v235 = vld [vmem:[%s213 + $0x20] sm:$0xf]
      %v236 = vld [vmem:[%s213 + $0x24] sm:$0xf]
      %v237 = vld [vmem:[%s213 + $0x28] sm:$0xf]
      %v238 = vld [vmem:[%s213 + $0x2c] sm:$0xf]
      %v239 = vld [vmem:[%s213 + $0x30] sm:$0xf]
      %v240 = vld [vmem:[%s213 + $0x34] sm:$0xf]
      %v241 = vld [vmem:[%s213 + $0x38] sm:$0xf]
      %v242 = vld [vmem:[%s213 + $0x3c] sm:$0xf]
      %v243 = vld [vmem:[%s213 + $0x40] sm:$0xf]
      %v244 = vld [vmem:[%s213 + $0x44] sm:$0xf]
      %v245 = vld [vmem:[%s213 + $0x48] sm:$0xf]
      %v246 = vld [vmem:[%s213 + $0x4c] sm:$0xf]
      %v247 = vld [vmem:[%s213 + $0x50] sm:$0xf]
      %v248 = vld [vmem:[%s213 + $0x54] sm:$0xf]
      %v249 = vld [vmem:[%s213 + $0x58] sm:$0xf]
      %v250 = vld [vmem:[%s213 + $0x5c] sm:$0xf]
      %v251 = vld [vmem:[%s213 + $0x60] sm:$0xf]
      %v252 = vld [vmem:[%s213 + $0x64] sm:$0xf]
      %v253 = vld [vmem:[%s213 + $0x68] sm:$0xf]
      %v254 = vld [vmem:[%s213 + $0x6c] sm:$0xf]
      %v255 = vld [vmem:[%s213 + $0x70] sm:$0xf]
      %v256 = vld [vmem:[%s213 + $0x74] sm:$0xf]
      %v257 = vld [vmem:[%s213 + $0x78] sm:$0xf]
      %v258 = vld [vmem:[%s213 + $0x7c] sm:$0xf]
      %v259 = vld [vmem:[%s213 + $0x80] sm:$0xf]
      %v260 = vld [vmem:[%s213 + $0x84] sm:$0xf]
      %v261 = vld [vmem:[%s213 + $0x88] sm:$0xf]
      %v262 = vld [vmem:[%s213 + $0x8c] sm:$0xf]
      %v263 = vld [vmem:[%s213 + $0x90] sm:$0xf]
      %v264 = vld [vmem:[%s213 + $0x94] sm:$0xf]
      %v265 = vld [vmem:[%s213 + $0x98] sm:$0xf]
      %v266 = vld [vmem:[%s213 + $0x9c] sm:$0xf]
      %v267 = vld [vmem:[%s213 + $0xa0] sm:$0xf]
      %v268 = vld [vmem:[%s213 + $0xa4] sm:$0xf]
      %v269 = vld [vmem:[%s213 + $0xa8] sm:$0xf]
      %v270 = vld [vmem:[%s213 + $0xac] sm:$0xf]
      %v271 = vld [vmem:[%s213 + $0xb0] sm:$0xf]
      %v272 = vld [vmem:[%s213 + $0xb4] sm:$0xf]
      %v273 = vld [vmem:[%s213 + $0xb8] sm:$0xf]
      %v274 = vld [vmem:[%s213 + $0xbc] sm:$0xf]
      %v275 = vld [vmem:[%s213 + $0xc0] sm:$0xf]
      %v276 = vld [vmem:[%s213 + $0xc4] sm:$0xf]
      %v277 = vld [vmem:[%s213 + $0xc8] sm:$0xf]
      %v278 = vld [vmem:[%s213 + $0xcc] sm:$0xf]
      %v279 = vld [vmem:[%s213 + $0xd0] sm:$0xf]
      %v280 = vld [vmem:[%s213 + $0xd4] sm:$0xf]
      %v281 = vld [vmem:[%s213 + $0xd8] sm:$0xf]
      %v282 = vld [vmem:[%s213 + $0xdc] sm:$0xf]
      %v283 = vld [vmem:[%s213 + $0xe0] sm:$0xf]
      %v284 = vld [vmem:[%s213 + $0xe4] sm:$0xf]
      %v285 = vld [vmem:[%s213 + $0xe8] sm:$0xf]
      %v286 = vld [vmem:[%s213 + $0xec] sm:$0xf]
      %v287 = vld [vmem:[%s213 + $0xf0] sm:$0xf]
      %v288 = vld [vmem:[%s213 + $0xf4] sm:$0xf]
      %v289 = vld [vmem:[%s213 + $0xf8] sm:$0xf]
      %v290 = vld [vmem:[%s213 + $0xfc] sm:$0xf]
      %v293 = vunpack.c.l.b16 %v225
      %v294 = vunpack.c.h.b16 %v225
      %v295 = vunpack.c.l.b16 %v226
      %v296 = vunpack.c.h.b16 %v226
      %v297 = vpack.c.b16 %v293, %v293
      %v298 = vpack.c.b16 %v294, %v294
      %v299 = vpack.c.b16 %v295, %v295
      %v300 = vpack.c.b16 %v296, %v296
      %v369 = vunpack.c.l.b16 %v227
      %v370 = vunpack.c.l.b16 %v228
      %v371 = vunpack.c.l.b16 %v229
      %v372 = vunpack.c.l.b16 %v230
      %v373 = vunpack.c.l.b16 %v231
      %v374 = vunpack.c.l.b16 %v232
      %v375 = vunpack.c.l.b16 %v233
      %v376 = vunpack.c.l.b16 %v234
      %v377 = vunpack.c.l.b16 %v235
      %v378 = vunpack.c.l.b16 %v236
      %v379 = vunpack.c.l.b16 %v237
      %v380 = vunpack.c.l.b16 %v238
      %v381 = vunpack.c.l.b16 %v239
      %v382 = vunpack.c.l.b16 %v240
      %v383 = vunpack.c.l.b16 %v241
      %v384 = vunpack.c.l.b16 %v242
      %v385 = vunpack.c.l.b16 %v243
      %v386 = vunpack.c.l.b16 %v244
      %v387 = vunpack.c.l.b16 %v245
      %v388 = vunpack.c.l.b16 %v246
      %v389 = vunpack.c.l.b16 %v247
      %v390 = vunpack.c.l.b16 %v248
      %v391 = vunpack.c.l.b16 %v249
      %v392 = vunpack.c.l.b16 %v250
      %v393 = vunpack.c.l.b16 %v251
      %v394 = vunpack.c.l.b16 %v252
      %v395 = vunpack.c.l.b16 %v253
      %v396 = vunpack.c.l.b16 %v254
      %v397 = vunpack.c.l.b16 %v255
      %v398 = vunpack.c.l.b16 %v256
      %v399 = vunpack.c.l.b16 %v257
      %v400 = vunpack.c.l.b16 %v258
      %v401 = vunpack.c.l.b16 %v259
      %v402 = vunpack.c.l.b16 %v260
      %v403 = vunpack.c.l.b16 %v261
      %v404 = vunpack.c.l.b16 %v262
      %v405 = vunpack.c.l.b16 %v263
      %v406 = vunpack.c.l.b16 %v264
      %v407 = vunpack.c.l.b16 %v265
      %v408 = vunpack.c.l.b16 %v266
      %v409 = vunpack.c.l.b16 %v267
      %v410 = vunpack.c.l.b16 %v268
      %v411 = vunpack.c.l.b16 %v269
      %v412 = vunpack.c.l.b16 %v270
      %v413 = vunpack.c.l.b16 %v271
      %v414 = vunpack.c.l.b16 %v272
      %v415 = vunpack.c.l.b16 %v273
      %v416 = vunpack.c.l.b16 %v274
      %v417 = vunpack.c.l.b16 %v275
      %v418 = vunpack.c.l.b16 %v276
      %v419 = vunpack.c.l.b16 %v277
      %v420 = vunpack.c.l.b16 %v278
      %v421 = vunpack.c.l.b16 %v279
      %v422 = vunpack.c.l.b16 %v280
      %v423 = vunpack.c.l.b16 %v281
      %v424 = vunpack.c.l.b16 %v282
      %v425 = vunpack.c.l.b16 %v283
      %v426 = vunpack.c.l.b16 %v284
      %v427 = vunpack.c.l.b16 %v285
      %v428 = vunpack.c.l.b16 %v286
      %v429 = vunpack.c.l.b16 %v287
      %v430 = vunpack.c.l.b16 %v288
      %v431 = vunpack.c.l.b16 %v289
      %v432 = vunpack.c.l.b16 %v290
      %v433 = vpack.c.b16 %v370, %v369
      %v434 = vpack.c.b16 %v372, %v371
      %v435 = vpack.c.b16 %v374, %v373
      %v436 = vpack.c.b16 %v376, %v375
      %v437 = vpack.c.b16 %v378, %v377
      %v438 = vpack.c.b16 %v380, %v379
      %v439 = vpack.c.b16 %v382, %v381
      %v440 = vpack.c.b16 %v384, %v383
      %v441 = vpack.c.b16 %v386, %v385
      %v442 = vpack.c.b16 %v388, %v387
      %v443 = vpack.c.b16 %v390, %v389
      %v444 = vpack.c.b16 %v392, %v391
      %v445 = vpack.c.b16 %v394, %v393
      %v446 = vpack.c.b16 %v396, %v395
      %v447 = vpack.c.b16 %v398, %v397
      %v448 = vpack.c.b16 %v400, %v399
      %v449 = vpack.c.b16 %v402, %v401
      %v450 = vpack.c.b16 %v404, %v403
      %v451 = vpack.c.b16 %v406, %v405
      %v452 = vpack.c.b16 %v408, %v407
      %v453 = vpack.c.b16 %v410, %v409
      %v454 = vpack.c.b16 %v412, %v411
      %v455 = vpack.c.b16 %v414, %v413
      %v456 = vpack.c.b16 %v416, %v415
      %v457 = vpack.c.b16 %v418, %v417
      %v458 = vpack.c.b16 %v420, %v419
      %v459 = vpack.c.b16 %v422, %v421
      %v460 = vpack.c.b16 %v424, %v423
      %v461 = vpack.c.b16 %v426, %v425
      %v462 = vpack.c.b16 %v428, %v427
      %v463 = vpack.c.b16 %v430, %v429
      %v464 = vpack.c.b16 %v432, %v431
      %497 = vmatpush.bf16.msra.mxu0 %v440
      %498 = vmatpush.bf16.msra.mxu0 %v439
      %499 = vmatpush.bf16.msra.mxu0 %v438
      %500 = vmatpush.bf16.msra.mxu0 %v437
      %501 = vmatpush.bf16.msra.mxu0 %v436
      %502 = vmatpush.bf16.msra.mxu0 %v435
      %503 = vmatpush.bf16.msra.mxu0 %v434
      %504 = vmatpush.bf16.msra.mxu0 %v433
      %505 = vmatmul.bf16.gmra.mxu0 %v297
      %v506 = vpop.f32.mrf.mxu0
      %v507 = vadd.f32 0.0, %v506
      %v508 = vpop.f32.mrf.mxu0
      %509 = vdwg.mxu0
      %510 = vmatpush.bf16.msra.mxu0 %v448
      %511 = vmatpush.bf16.msra.mxu0 %v447
      %512 = vmatpush.bf16.msra.mxu0 %v446
      %513 = vmatpush.bf16.msra.mxu0 %v445
      %514 = vmatpush.bf16.msra.mxu0 %v444
      %515 = vmatpush.bf16.msra.mxu0 %v443
      %516 = vmatpush.bf16.msra.mxu0 %v442
      %517 = vmatpush.bf16.msra.mxu0 %v441
      %518 = vmatmul.bf16.gmra.mxu0 %v298
      %v519 = vpop.f32.mrf.mxu0
      %v520 = vadd.f32 %v507, %v519
      %v521 = vpop.f32.mrf.mxu0
      %522 = vdwg.mxu0
      %523 = vmatpush.bf16.msra.mxu0 %v456
      %524 = vmatpush.bf16.msra.mxu0 %v455
      %525 = vmatpush.bf16.msra.mxu0 %v454
      %526 = vmatpush.bf16.msra.mxu0 %v453
      %527 = vmatpush.bf16.msra.mxu0 %v452
      %528 = vmatpush.bf16.msra.mxu0 %v451
      %529 = vmatpush.bf16.msra.mxu0 %v450
      %530 = vmatpush.bf16.msra.mxu0 %v449
      %531 = vmatmul.bf16.gmra.mxu0 %v299
      %v532 = vpop.f32.mrf.mxu0
      %v533 = vadd.f32 %v520, %v532
      %v534 = vpop.f32.mrf.mxu0
      %535 = vdwg.mxu0
      %536 = vmatpush.bf16.msra.mxu0 %v464
      %537 = vmatpush.bf16.msra.mxu0 %v463
      %538 = vmatpush.bf16.msra.mxu0 %v462
      %539 = vmatpush.bf16.msra.mxu0 %v461
      %540 = vmatpush.bf16.msra.mxu0 %v460
      %541 = vmatpush.bf16.msra.mxu0 %v459
      %542 = vmatpush.bf16.msra.mxu0 %v458
      %543 = vmatpush.bf16.msra.mxu0 %v457
      %544 = vmatmul.bf16.gmra.mxu0 %v300
      %v545 = vpop.f32.mrf.mxu0
      %v546 = vadd.f32 %v533, %v545
      %v547 = vpop.f32.mrf.mxu0
      %548 = vdwg.mxu0
      %v549 = vadd.f32 %v224, %v546
      %550 = vst [vmem:[#allocation2] sm:$0xff] %v549
      %p551 = scmp.eq.s32.totalorder %s19, 2
      // Predicated region
      $region37: #{network_forward.10} parent=31 // pred_check
        %p552 = pneg %p551
      $region38: #{network_forward.10} parent=31 // pred_check_branch
        %554 = sbr.rel (%p552) target = $region40
      $region39: #{network_forward.10} parent=31 // pred_region
        %v555 = vld [vmem:[#allocation2] sm:$0xff]
        %v556 = vld [vmem:[%s2] sm:$0x1]
        %v558 = vperm.slane %v556, 0
        %v560 = vadd.f32 %v555, %v558
        %v561 = vmax.f32 %v560, 0.0
        %v562 = vpack.c.bf16 %v561, %v561
        %563 = vst [vmem:[%s218] sm:$0xf] %v562
      $region40: #{network_forward.10} parent=31 // pred_fallthru
        _
      %p564 = scmp.lt.s32.totalorder %s18, 0
      %s565 = scalar_select %p564, %s18, 0
      %s566 = smul.addr %s565, 4
      %s567 = scalar_lea.vmem %s3, %s566
      // Predicated region
      $region41: #{network_forward.10} parent=31 // pred_check
        %p568 = pneg %p119
      $region42: #{network_forward.10} parent=31 // pred_check_branch
        %570 = sbr.rel (%p568) target = $region44
      $region43: #{network_forward.10} parent=31 // pred_region
        _
      $region44: #{network_forward.10} parent=31 // pred_fallthru
        _
      // Predicated region
      $region45: #{network_forward.10} parent=31 // pred_check
        %p571 = pneg %p119
      $region46: #{network_forward.10} parent=31 // pred_check_branch
        %573 = sbr.rel (%p571) target = $region48
      $region47: #{network_forward.10} parent=31 // pred_region
        %p574 = scmp.lt.s32.totalorder %s18, 0
        %s575 = scalar_select %p574, %s18, 0
        %s576 = smul.addr %s575, 4
        %s577 = scalar_lea.vmem %s3, %s576
      $region48: #{network_forward.10} parent=31 // pred_fallthru
        _
    $region32: #{network_forward.10} parent=5 // pred_fallthru
      _
    %p578 = scmp.le.s32.totalorder 2, %s9
    // Predicated region
    $region49: #{network_forward.10} parent=5 // pred_check
      %p579 = pneg %p578
    $region50: #{network_forward.10} parent=5 // pred_check_branch
      %581 = sbr.rel (%p579) target = $region52
    $region51: #{network_forward.10} parent=5 // pred_region
      %s582 = ssub.s32 %s9, 2
    $region52: #{network_forward.10} parent=5 // pred_fallthru
      _
  $region6: #{network_forward.10} parent=0 // loop_footer
    %s13 = sadd.s32 1, %s9
  $region7: #{network_forward.10} parent=0 // loop_footer_branch
    %8 = sbr.rel target = $region3
  $region8: #{network_forward.10} parent=0 // loop_exit
    _

// kernel: network_forward.11
$region0: #{network_forward.11}
  #allocation0 [shape = 'u32[]', space=smem, size = 0x4, offset = 0x4, fixed_abs, tag = 'smem constant byte address 0x4 - core index']
  #allocation1 [shape = 'u32[72,128]{1,0:T(1,128)}', space=vmem, size = 0x9000, scoped, tag = 'internal scratch']
  #allocation2 [shape = 'f32[8,128]{1,0:T(8,128)}', space=vmem, size = 0x1000, scoped, tag = 'scratch operand']
  %s0 = inlined_call_operand.vmem [shape: bf16[8,128], index: 0, kind: input, shape index: {}]
  %s1 = inlined_call_operand.vmem [shape: bf16[128,128], index: 1, kind: input, shape index: {}]
  %s2 = inlined_call_operand.vmem [shape: f32[1,128], index: 2, kind: input, shape index: {}]
  %s3 = inlined_call_operand.vmem [shape: f32[8,128], index: 3, kind: output, shape index: {}]
  %s4 = sld [smem:[#allocation0]]
  $region30: #{network_forward.11} parent=0
    _
  %s6 = ssub.s32 1, %s4
  %s7 = scalar_select 0, %s6, %s4
  // Predicated region
  $region2: #{network_forward.11} parent=0 // pred_check
    _
  $region3: #{network_forward.11} parent=0 // pred_check_branch
    %9 = sbr.rel (0) target = $region5
  $region4: #{network_forward.11} parent=0 // pred_region
    _
  $region5: #{network_forward.11} parent=0 // pred_fallthru
    _
  // Predicated region
  $region6: #{network_forward.11} parent=0 // pred_check
    _
  $region7: #{network_forward.11} parent=0 // pred_check_branch
    %11 = sbr.rel (0) target = $region9
  $region8: #{network_forward.11} parent=0 // pred_region
    _
  $region9: #{network_forward.11} parent=0 // pred_fallthru
    _
  // Predicated region
  $region10: #{network_forward.11} parent=0 // pred_check
    _
  $region11: #{network_forward.11} parent=0 // pred_check_branch
    %13 = sbr.rel (0) target = $region13
  $region12: #{network_forward.11} parent=0 // pred_region
    _
  $region13: #{network_forward.11} parent=0 // pred_fallthru
    _
  %p14 = scmp.eq.s32.totalorder 0, 0
  // Predicated region
  $region14: #{network_forward.11} parent=0 // pred_check
    %p15 = pneg %p14
  $region15: #{network_forward.11} parent=0 // pred_check_branch
    %17 = sbr.rel (%p15) target = $region17
  $region16: #{network_forward.11} parent=0 // pred_region
    %18 = vst [vmem:[#allocation2] sm:$0xff] 0.0
  $region17: #{network_forward.11} parent=0 // pred_fallthru
    _
  %v19 = vld [vmem:[#allocation2] sm:$0xff]
  %v20 = vld [vmem:[%s0] sm:$0xf]
  %v21 = vld [vmem:[%s1] sm:$0xf]
  %v22 = vld [vmem:[%s1 + $0x4] sm:$0xf]
  %v23 = vld [vmem:[%s1 + $0x8] sm:$0xf]
  %v24 = vld [vmem:[%s1 + $0xc] sm:$0xf]
  %v25 = vld [vmem:[%s1 + $0x10] sm:$0xf]
  %v26 = vld [vmem:[%s1 + $0x14] sm:$0xf]
  %v27 = vld [vmem:[%s1 + $0x18] sm:$0xf]
  %v28 = vld [vmem:[%s1 + $0x1c] sm:$0xf]
  %v29 = vld [vmem:[%s1 + $0x20] sm:$0xf]
  %v30 = vld [vmem:[%s1 + $0x24] sm:$0xf]
  %v31 = vld [vmem:[%s1 + $0x28] sm:$0xf]
  %v32 = vld [vmem:[%s1 + $0x2c] sm:$0xf]
  %v33 = vld [vmem:[%s1 + $0x30] sm:$0xf]
  %v34 = vld [vmem:[%s1 + $0x34] sm:$0xf]
  %v35 = vld [vmem:[%s1 + $0x38] sm:$0xf]
  %v36 = vld [vmem:[%s1 + $0x3c] sm:$0xf]
  %v53 = vunpack.c.l.b16 %v21
  %v54 = vunpack.c.l.b16 %v22
  %v55 = vunpack.c.l.b16 %v23
  %v56 = vunpack.c.l.b16 %v24
  %v57 = vunpack.c.l.b16 %v25
  %v58 = vunpack.c.l.b16 %v26
  %v59 = vunpack.c.l.b16 %v27
  %v60 = vunpack.c.l.b16 %v28
  %v61 = vunpack.c.l.b16 %v29
  %v62 = vunpack.c.l.b16 %v30
  %v63 = vunpack.c.l.b16 %v31
  %v64 = vunpack.c.l.b16 %v32
  %v65 = vunpack.c.l.b16 %v33
  %v66 = vunpack.c.l.b16 %v34
  %v67 = vunpack.c.l.b16 %v35
  %v68 = vunpack.c.l.b16 %v36
  %v69 = vpack.c.b16 %v54, %v53
  %v70 = vpack.c.b16 %v56, %v55
  %v71 = vpack.c.b16 %v58, %v57
  %v72 = vpack.c.b16 %v60, %v59
  %v73 = vpack.c.b16 %v62, %v61
  %v74 = vpack.c.b16 %v64, %v63
  %v75 = vpack.c.b16 %v66, %v65
  %v76 = vpack.c.b16 %v68, %v67
  %85 = vmatpush.bf16.msra.mxu0 %v76
  %86 = vmatpush.bf16.msra.mxu0 %v75
  %87 = vmatpush.bf16.msra.mxu0 %v74
  %88 = vmatpush.bf16.msra.mxu0 %v73
  %89 = vmatpush.bf16.msra.mxu0 %v72
  %90 = vmatpush.bf16.msra.mxu0 %v71
  %91 = vmatpush.bf16.msra.mxu0 %v70
  %92 = vmatpush.bf16.msra.mxu0 %v69
  %93 = vmatmul.bf16.gmra.mxu0 %v20
  %v94 = vpop.f32.mrf.mxu0
  %v95 = vadd.f32 0.0, %v94
  %v96 = vpop.f32.mrf.mxu0
  %97 = vdwg.mxu0
  %v98 = vadd.f32 %v19, %v95
  %99 = vst [vmem:[#allocation2] sm:$0xff] %v98
  // Predicated region
  $region18: #{network_forward.11} parent=0 // pred_check
    %p100 = pneg %p14
  $region19: #{network_forward.11} parent=0 // pred_check_branch
    %102 = sbr.rel (%p100) target = $region21
  $region20: #{network_forward.11} parent=0 // pred_region
    %v103 = vld [vmem:[#allocation2] sm:$0xff]
    %v104 = vld [vmem:[%s2] sm:$0x1]
    %v106 = vperm.slane %v104, 0
    %v108 = vadd.f32 %v103, %v106
    %109 = vst [vmem:[%s3] sm:$0xff] %v108
  $region21: #{network_forward.11} parent=0 // pred_fallthru
    _
  // Predicated region
  $region22: #{network_forward.11} parent=0 // pred_check
    _
  $region23: #{network_forward.11} parent=0 // pred_check_branch
    %111 = sbr.rel (0) target = $region25
  $region24: #{network_forward.11} parent=0 // pred_region
    _
  $region25: #{network_forward.11} parent=0 // pred_fallthru
    _
  // Predicated region
  $region26: #{network_forward.11} parent=0 // pred_check
    _
  $region27: #{network_forward.11} parent=0 // pred_check_branch
    %113 = sbr.rel (0) target = $region29
  $region28: #{network_forward.11} parent=0 // pred_region
    _
  $region29: #{network_forward.11} parent=0 // pred_fallthru
    _

// kernel: network_forward.12
$region0: #{network_forward.12}
  #allocation0 [shape = 'u32[]', space=smem, size = 0x4, offset = 0x4, fixed_abs, tag = 'smem constant byte address 0x4 - core index']
  #allocation1 [shape = 'u32[72,128]{1,0:T(1,128)}', space=vmem, size = 0x9000, scoped, tag = 'internal scratch']
  #allocation2 [shape = 'f32[8,128]{1,0:T(8,128)}', space=vmem, size = 0x1000, scoped, tag = 'scratch operand']
  %s0 = inlined_call_operand.vmem [shape: bf16[8,128], index: 0, kind: input, shape index: {}]
  %s1 = inlined_call_operand.vmem [shape: bf16[128,128], index: 1, kind: input, shape index: {}]
  %s2 = inlined_call_operand.vmem [shape: f32[1,128], index: 2, kind: input, shape index: {}]
  %s3 = inlined_call_operand.vmem [shape: bf16[8,128], index: 3, kind: output, shape index: {}]
  %s4 = sld [smem:[#allocation0]]
  $region30: #{network_forward.12} parent=0
    _
  %s6 = ssub.s32 1, %s4
  %s7 = scalar_select 0, %s6, %s4
  // Predicated region
  $region2: #{network_forward.12} parent=0 // pred_check
    _
  $region3: #{network_forward.12} parent=0 // pred_check_branch
    %9 = sbr.rel (0) target = $region5
  $region4: #{network_forward.12} parent=0 // pred_region
    _
  $region5: #{network_forward.12} parent=0 // pred_fallthru
    _
  // Predicated region
  $region6: #{network_forward.12} parent=0 // pred_check
    _
  $region7: #{network_forward.12} parent=0 // pred_check_branch
    %11 = sbr.rel (0) target = $region9
  $region8: #{network_forward.12} parent=0 // pred_region
    _
  $region9: #{network_forward.12} parent=0 // pred_fallthru
    _
  // Predicated region
  $region10: #{network_forward.12} parent=0 // pred_check
    _
  $region11: #{network_forward.12} parent=0 // pred_check_branch
    %13 = sbr.rel (0) target = $region13
  $region12: #{network_forward.12} parent=0 // pred_region
    _
  $region13: #{network_forward.12} parent=0 // pred_fallthru
    _
  %p14 = scmp.eq.s32.totalorder 0, 0
  // Predicated region
  $region14: #{network_forward.12} parent=0 // pred_check
    %p15 = pneg %p14
  $region15: #{network_forward.12} parent=0 // pred_check_branch
    %17 = sbr.rel (%p15) target = $region17
  $region16: #{network_forward.12} parent=0 // pred_region
    %18 = vst [vmem:[#allocation2] sm:$0xff] 0.0
  $region17: #{network_forward.12} parent=0 // pred_fallthru
    _
  %v19 = vld [vmem:[#allocation2] sm:$0xff]
  %v20 = vld [vmem:[%s0] sm:$0xf]
  %v21 = vld [vmem:[%s1] sm:$0xf]
  %v22 = vld [vmem:[%s1 + $0x4] sm:$0xf]
  %v23 = vld [vmem:[%s1 + $0x8] sm:$0xf]
  %v24 = vld [vmem:[%s1 + $0xc] sm:$0xf]
  %v25 = vld [vmem:[%s1 + $0x10] sm:$0xf]
  %v26 = vld [vmem:[%s1 + $0x14] sm:$0xf]
  %v27 = vld [vmem:[%s1 + $0x18] sm:$0xf]
  %v28 = vld [vmem:[%s1 + $0x1c] sm:$0xf]
  %v29 = vld [vmem:[%s1 + $0x20] sm:$0xf]
  %v30 = vld [vmem:[%s1 + $0x24] sm:$0xf]
  %v31 = vld [vmem:[%s1 + $0x28] sm:$0xf]
  %v32 = vld [vmem:[%s1 + $0x2c] sm:$0xf]
  %v33 = vld [vmem:[%s1 + $0x30] sm:$0xf]
  %v34 = vld [vmem:[%s1 + $0x34] sm:$0xf]
  %v35 = vld [vmem:[%s1 + $0x38] sm:$0xf]
  %v36 = vld [vmem:[%s1 + $0x3c] sm:$0xf]
  %v53 = vunpack.c.l.b16 %v21
  %v54 = vunpack.c.l.b16 %v22
  %v55 = vunpack.c.l.b16 %v23
  %v56 = vunpack.c.l.b16 %v24
  %v57 = vunpack.c.l.b16 %v25
  %v58 = vunpack.c.l.b16 %v26
  %v59 = vunpack.c.l.b16 %v27
  %v60 = vunpack.c.l.b16 %v28
  %v61 = vunpack.c.l.b16 %v29
  %v62 = vunpack.c.l.b16 %v30
  %v63 = vunpack.c.l.b16 %v31
  %v64 = vunpack.c.l.b16 %v32
  %v65 = vunpack.c.l.b16 %v33
  %v66 = vunpack.c.l.b16 %v34
  %v67 = vunpack.c.l.b16 %v35
  %v68 = vunpack.c.l.b16 %v36
  %v69 = vpack.c.b16 %v54, %v53
  %v70 = vpack.c.b16 %v56, %v55
  %v71 = vpack.c.b16 %v58, %v57
  %v72 = vpack.c.b16 %v60, %v59
  %v73 = vpack.c.b16 %v62, %v61
  %v74 = vpack.c.b16 %v64, %v63
  %v75 = vpack.c.b16 %v66, %v65
  %v76 = vpack.c.b16 %v68, %v67
  %85 = vmatpush.bf16.msra.mxu0 %v76
  %86 = vmatpush.bf16.msra.mxu0 %v75
  %87 = vmatpush.bf16.msra.mxu0 %v74
  %88 = vmatpush.bf16.msra.mxu0 %v73
  %89 = vmatpush.bf16.msra.mxu0 %v72
  %90 = vmatpush.bf16.msra.mxu0 %v71
  %91 = vmatpush.bf16.msra.mxu0 %v70
  %92 = vmatpush.bf16.msra.mxu0 %v69
  %93 = vmatmul.bf16.gmra.mxu0 %v20
  %v94 = vpop.f32.mrf.mxu0
  %v95 = vadd.f32 0.0, %v94
  %v96 = vpop.f32.mrf.mxu0
  %97 = vdwg.mxu0
  %v98 = vadd.f32 %v19, %v95
  %99 = vst [vmem:[#allocation2] sm:$0xff] %v98
  // Predicated region
  $region18: #{network_forward.12} parent=0 // pred_check
    %p100 = pneg %p14
  $region19: #{network_forward.12} parent=0 // pred_check_branch
    %102 = sbr.rel (%p100) target = $region21
  $region20: #{network_forward.12} parent=0 // pred_region
    %v103 = vld [vmem:[#allocation2] sm:$0xff]
    %v104 = vld [vmem:[%s2] sm:$0x1]
    %v106 = vperm.slane %v104, 0
    %v108 = vadd.f32 %v103, %v106
    %v109 = vmax.f32 %v108, 0.0
    %v110 = vpack.c.bf16 %v109, %v109
    %111 = vst [vmem:[%s3] sm:$0xf] %v110
  $region21: #{network_forward.12} parent=0 // pred_fallthru
    _
  // Predicated region
  $region22: #{network_forward.12} parent=0 // pred_check
    _
  $region23: #{network_forward.12} parent=0 // pred_check_branch
    %113 = sbr.rel (0) target = $region25
  $region24: #{network_forward.12} parent=0 // pred_region
    _
  $region25: #{network_forward.12} parent=0 // pred_fallthru
    _
  // Predicated region
  $region26: #{network_forward.12} parent=0 // pred_check
    _
  $region27: #{network_forward.12} parent=0 // pred_check_branch
    %115 = sbr.rel (0) target = $region29
  $region28: #{network_forward.12} parent=0 // pred_region
    _
  $region29: #{network_forward.12} parent=0 // pred_fallthru
    _

// kernel: network_forward.13
$region0: #{network_forward.13}
  #allocation0 [shape = 'u32[]', space=smem, size = 0x4, offset = 0x4, fixed_abs, tag = 'smem constant byte address 0x4 - core index']
  #allocation1 [shape = 'u32[72,128]{1,0:T(1,128)}', space=vmem, size = 0x9000, scoped, tag = 'internal scratch']
  #allocation2 [shape = 'f32[8,128]{1,0:T(8,128)}', space=vmem, size = 0x1000, scoped, tag = 'scratch operand']
  %s0 = inlined_call_operand.vmem [shape: bf16[8,128], index: 0, kind: input, shape index: {}]
  %s1 = inlined_call_operand.vmem [shape: bf16[128,128], index: 1, kind: input, shape index: {}]
  %s2 = inlined_call_operand.vmem [shape: f32[1,128], index: 2, kind: input, shape index: {}]
  %s3 = inlined_call_operand.hbm [shape: f32[8,128], index: 3, kind: output, shape index: {}]
  %s4 = sld [smem:[#allocation0]]
  $region30: #{network_forward.13} parent=0
    _
  %s6 = ssub.s32 1, %s4
  %s7 = scalar_select 0, %s6, %s4
  $region1: #{network_forward.13} parent=0
    #allocation3 [shape = 'u8[4096]{0}', space=vmem, size = 0x1000, scoped, tag = 'output window, operand 0, single buffered']
    #allocation4 [shape = 's32[1]{0}', space=sflag, size = 0x4, scoped, tag = 'scoped memory for network_forward.13']
    %8 = vsyncpa [#allocation4], 0
    // Predicated region
    $region2: #{network_forward.13} parent=1 // pred_check
      _
    $region3: #{network_forward.13} parent=1 // pred_check_branch
      %10 = sbr.rel (0) target = $region5
    $region4: #{network_forward.13} parent=1 // pred_region
      _
    $region5: #{network_forward.13} parent=1 // pred_fallthru
      _
    // Predicated region
    $region6: #{network_forward.13} parent=1 // pred_check
      _
    $region7: #{network_forward.13} parent=1 // pred_check_branch
      %12 = sbr.rel (0) target = $region9
    $region8: #{network_forward.13} parent=1 // pred_region
      _
    $region9: #{network_forward.13} parent=1 // pred_fallthru
      _
    // Predicated region
    $region10: #{network_forward.13} parent=1 // pred_check
      _
    $region11: #{network_forward.13} parent=1 // pred_check_branch
      %14 = sbr.rel (0) target = $region13
    $region12: #{network_forward.13} parent=1 // pred_region
      _
    $region13: #{network_forward.13} parent=1 // pred_fallthru
      _
    %p15 = scmp.eq.s32.totalorder 0, 0
    // Predicated region
    $region14: #{network_forward.13} parent=1 // pred_check
      %p16 = pneg %p15
    $region15: #{network_forward.13} parent=1 // pred_check_branch
      %18 = sbr.rel (%p16) target = $region17
    $region16: #{network_forward.13} parent=1 // pred_region
      %19 = vst [vmem:[#allocation2] sm:$0xff] 0.0
    $region17: #{network_forward.13} parent=1 // pred_fallthru
      _
    %v20 = vld [vmem:[#allocation2] sm:$0xff]
    %v21 = vld [vmem:[%s0] sm:$0xf]
    %v22 = vld [vmem:[%s1] sm:$0xf]
    %v23 = vld [vmem:[%s1 + $0x4] sm:$0xf]
    %v24 = vld [vmem:[%s1 + $0x8] sm:$0xf]
    %v25 = vld [vmem:[%s1 + $0xc] sm:$0xf]
    %v26 = vld [vmem:[%s1 + $0x10] sm:$0xf]
    %v27 = vld [vmem:[%s1 + $0x14] sm:$0xf]
    %v28 = vld [vmem:[%s1 + $0x18] sm:$0xf]
    %v29 = vld [vmem:[%s1 + $0x1c] sm:$0xf]
    %v30 = vld [vmem:[%s1 + $0x20] sm:$0xf]
    %v31 = vld [vmem:[%s1 + $0x24] sm:$0xf]
    %v32 = vld [vmem:[%s1 + $0x28] sm:$0xf]
    %v33 = vld [vmem:[%s1 + $0x2c] sm:$0xf]
    %v34 = vld [vmem:[%s1 + $0x30] sm:$0xf]
    %v35 = vld [vmem:[%s1 + $0x34] sm:$0xf]
    %v36 = vld [vmem:[%s1 + $0x38] sm:$0xf]
    %v37 = vld [vmem:[%s1 + $0x3c] sm:$0xf]
    %v54 = vunpack.c.l.b16 %v22
    %v55 = vunpack.c.l.b16 %v23
    %v56 = vunpack.c.l.b16 %v24
    %v57 = vunpack.c.l.b16 %v25
    %v58 = vunpack.c.l.b16 %v26
    %v59 = vunpack.c.l.b16 %v27
    %v60 = vunpack.c.l.b16 %v28
    %v61 = vunpack.c.l.b16 %v29
    %v62 = vunpack.c.l.b16 %v30
    %v63 = vunpack.c.l.b16 %v31
    %v64 = vunpack.c.l.b16 %v32
    %v65 = vunpack.c.l.b16 %v33
    %v66 = vunpack.c.l.b16 %v34
    %v67 = vunpack.c.l.b16 %v35
    %v68 = vunpack.c.l.b16 %v36
    %v69 = vunpack.c.l.b16 %v37
    %v70 = vpack.c.b16 %v55, %v54
    %v71 = vpack.c.b16 %v57, %v56
    %v72 = vpack.c.b16 %v59, %v58
    %v73 = vpack.c.b16 %v61, %v60
    %v74 = vpack.c.b16 %v63, %v62
    %v75 = vpack.c.b16 %v65, %v64
    %v76 = vpack.c.b16 %v67, %v66
    %v77 = vpack.c.b16 %v69, %v68
    %86 = vmatpush.bf16.msra.mxu0 %v77
    %87 = vmatpush.bf16.msra.mxu0 %v76
    %88 = vmatpush.bf16.msra.mxu0 %v75
    %89 = vmatpush.bf16.msra.mxu0 %v74
    %90 = vmatpush.bf16.msra.mxu0 %v73
    %91 = vmatpush.bf16.msra.mxu0 %v72
    %92 = vmatpush.bf16.msra.mxu0 %v71
    %93 = vmatpush.bf16.msra.mxu0 %v70
    %94 = vmatmul.bf16.gmra.mxu0 %v21
    %v95 = vpop.f32.mrf.mxu0
    %v96 = vadd.f32 0.0, %v95
    %v97 = vpop.f32.mrf.mxu0
    %98 = vdwg.mxu0
    %v99 = vadd.f32 %v20, %v96
    %100 = vst [vmem:[#allocation2] sm:$0xff] %v99
    // Predicated region
    $region18: #{network_forward.13} parent=1 // pred_check
      %p101 = pneg %p15
    $region19: #{network_forward.13} parent=1 // pred_check_branch
      %103 = sbr.rel (%p101) target = $region21
    $region20: #{network_forward.13} parent=1 // pred_region
      %v104 = vld [vmem:[#allocation2] sm:$0xff]
      %v105 = vld [vmem:[%s2] sm:$0x1]
      %v107 = vperm.slane %v105, 0
      %v109 = vadd.f32 %v104, %v107
      %v110 = vxor.u32 %v109, 2147483648
      %v111 = vmul.f32 %v110, 1.442695
      %v112 = vpow.pop %v111
      %v113 = vadd.f32 %v112, 1.0
      %v114 = vrcp.pop %v113
      %v115 = vmul.f32 %v113, %v114
      %v116 = vsub.f32 1.0, %v115
      %v117 = vmul.f32 %v114, %v116
      %v118 = vadd.f32 %v114, %v117
      %vm119 = vweird.f32 %v113
      %vm120 = vweird.f32 %v114
      %vm121 = vmor %vm119, %vm120
      %v122 = vsel %vm121, %v114, %v118
      %v123 = vand.u32 2147483647, %v113
      %vm124 = vcmp.eq.f32.partialorder %v123, 8.507059e+37
      %v125 = vand.u32 %v113, 2147483648
      %v126 = vor.u32 1.1754944e-38, %v125
      %v127 = vsel %vm124, %v126, %v122
      %v128 = vmul.f32 1.0, %v127
      %129 = vst [vmem:[#allocation3] sm:$0xff] %v128
    $region21: #{network_forward.13} parent=1 // pred_fallthru
      _
    // Predicated region
    $region22: #{network_forward.13} parent=1 // pred_check
      _
    $region23: #{network_forward.13} parent=1 // pred_check_branch
      %131 = sbr.rel (0) target = $region25
    $region24: #{network_forward.13} parent=1 // pred_region
      %133 = vsyncadd [#allocation4], 0
      %s135 = sshll.u32 [#allocation3], 4
      %s136 = int_to_ptr.vmem [resolvable:$true] %s135
      %s137 = sshll.u32 %s3, 4
      %s138 = int_to_ptr.hbm [resolvable:$true] %s137
      %140 = dma.vmem_to_hbm [thread:$0]  %s136, 128, %s138, [#allocation4]
    $region25: #{network_forward.13} parent=1 // pred_fallthru
      _
    // Predicated region
    $region26: #{network_forward.13} parent=1 // pred_check
      _
    $region27: #{network_forward.13} parent=1 // pred_check_branch
      %142 = sbr.rel (0) target = $region29
    $region28: #{network_forward.13} parent=1 // pred_region
      %144 = dma.done [#allocation4], 128
    $region29: #{network_forward.13} parent=1 // pred_fallthru
      _
    %145 = vsyncpa [#allocation4], 1

</llo_original>
